<compile_context>
chip_gen: v6e
topology: v6e:2x2x1
jax: 0.10.0
libtpu: 0.0.40
codegen_flags: <defaults>
</compile_context>

<pallas_src>
import jax
import jax.numpy as jnp
from jax.experimental import pallas as pl
from jax.experimental.pallas import tpu as pltpu

_VMEM_LIMIT = 32 * 1024 * 1024   # explicit scoped-VMEM limit (v5e default is only 16 MiB)
_NODE_BLOCK = 256                # node tile: 256-aligned for v6e/v7x MXU, fits v7x VMEM


def _round_up(x, m):
    return (x + m - 1) // m * m


def _node_tiling(n):
    """Node block BN (multiple of 8, <= _NODE_BLOCK) and padded node count Np."""
    bn = min(_NODE_BLOCK, _round_up(n, 8))
    return bn, _round_up(n, bn)


def _pad_nodes(x, np_):
    n = x.shape[0]
    if np_ == n:
        return x
    pad = [(0, np_ - n)] + [(0, 0)] * (x.ndim - 1)
    return jnp.pad(x, pad)


# ----------------------------------------------------------------------------
# Kernel 1: relation-fused linear projection   proj = x @ [W_0 | ... | W_2R] + b
# ----------------------------------------------------------------------------
def _project_kernel(x_ref, w_ref, b_ref, o_ref):
    # x_ref: (BN, F) bf16   w_ref: (F, R1*H) bf16   b_ref: (1, R1*H) f32
    o_ref[...] = (
        jnp.dot(x_ref[...], w_ref[...], preferred_element_type=jnp.float32)
        + b_ref[...]
    )


def project_all(x, W, b):
    """x: (N, F), W: (R1, F, H), b: (R1, H) -> (N, R1*H) f32 (relation-fused)."""
    N, F = x.shape
    R1, _, H = W.shape
    RH = R1 * H
    W2 = jnp.transpose(W, (1, 0, 2)).reshape(F, RH).astype(jnp.bfloat16)
    b2 = b.reshape(1, RH)
    BN, Np = _node_tiling(N)
    xp = _pad_nodes(x, Np).astype(jnp.bfloat16)
    out = pl.pallas_call(
        _project_kernel,
        out_shape=jax.ShapeDtypeStruct((Np, RH), jnp.float32),
        grid=(Np // BN,),
        in_specs=[
            pl.BlockSpec((BN, F), lambda i: (i, 0)),
            pl.BlockSpec((F, RH), lambda i: (0, 0)),
            pl.BlockSpec((1, RH), lambda i: (0, 0)),
        ],
        out_specs=pl.BlockSpec((BN, RH), lambda i: (i, 0)),
        compiler_params=pltpu.CompilerParams(
            dimension_semantics=("parallel",),
            vmem_limit_bytes=_VMEM_LIMIT,
        ),
    )(xp, W2, b2)
    return out[:N]


# ----------------------------------------------------------------------------
# Kernel 2a: non-attention reduce:  relu(mean_j z_j)   (self_h concatenated outside)
# ----------------------------------------------------------------------------
def _reduce_mean_kernel(z_ref, o_ref):
    # z_ref: (BN, M, H)   o_ref: (BN, H)
    o_ref[...] = jnp.maximum(jnp.mean(z_ref[...], axis=1), 0.0)


def reduce_mean(z):
    N, M, H = z.shape
    BN, Np = _node_tiling(N)
    out = pl.pallas_call(
        _reduce_mean_kernel,
        out_shape=jax.ShapeDtypeStruct((Np, H), jnp.float32),
        grid=(Np // BN,),
        in_specs=[pl.BlockSpec((BN, M, H), lambda i: (i, 0, 0))],
        out_specs=pl.BlockSpec((BN, H), lambda i: (i, 0)),
        compiler_params=pltpu.CompilerParams(
            dimension_semantics=("parallel",),
            vmem_limit_bytes=_VMEM_LIMIT,
        ),
    )(_pad_nodes(z, Np))
    return out[:N]


# ----------------------------------------------------------------------------
# Kernel 2b: attention reduce (last layer), mirrors smallGraphAlignLayer.reduce
#            for the "'m' in mailbox" branch. Only the z-rows x m-cols block of the
#            reference's (2M,2M) masked product is nonzero, so we compute (M,M)
#            directly; the reference's intermediate normalisations cancel in its
#            final renorm, leaving w_j ∝ s_j * exp(e_j).
# ----------------------------------------------------------------------------
def _reduce_attn_kernel(sh_ref, z_ref, m_ref, a_ref, o_ref):
    H = sh_ref.shape[-1]
    sh = sh_ref[...]                                  # (BN, H)
    z = z_ref[...]                                    # (BN, M, H)
    m = m_ref[...]                                    # (BN, M, H)
    a_z = a_ref[:, :H]                                # (1, H)  attn weight on z part
    a_s = a_ref[:, H:]                                # (1, H)  attn weight on self_h part

    # e_j = leaky_relu(a · [z_j, self_h])   (nn.Linear(2H, 1, bias=False), slope 0.01)
    e = (jnp.sum(z * a_z[:, None, :], axis=-1, keepdims=True)
         + jnp.sum(sh * a_s, axis=-1, keepdims=True)[:, None, :])       # (BN, M, 1)
    e = jnp.where(e > 0, e, 0.01 * e)

    # attn_w[j,k] = exp(-||z_j - m_k||_2)  via  ||.||^2 = zz + mm - 2 z·m  (MXU, bf16)
    zz = jnp.sum(z * z, axis=-1, keepdims=True)                         # (BN, M, 1)
    mm = jnp.sum(m * m, axis=-1)[:, None, :]                            # (BN, 1, M)
    cross = jnp.einsum('bjh,bkh->bjk',
                       z.astype(jnp.bfloat16), m.astype(jnp.bfloat16),
                       preferred_element_type=jnp.float32)              # (BN, M, M)
    d2 = jnp.maximum(zz + mm - 2.0 * cross, 0.0)
    attn_w = jnp.exp(-jnp.sqrt(d2))

    # mask_k = (m_k.sum() != 0)  — DGL zero-padded-mailbox proxy
    mask = (jnp.sum(m, axis=-1) != 0.0).astype(jnp.float32)[:, None, :]  # (BN, 1, M)
    s = jnp.sum(attn_w * mask, axis=-1, keepdims=True)                   # (BN, M, 1)

    # single final normalisation: w_j ∝ s_j * exp(e_j)
    w = s * jnp.exp(e - jnp.max(e, axis=1, keepdims=True))               # (BN, M, 1)
    w = w * pl.reciprocal(jnp.sum(w, axis=1, keepdims=True), approx=True)

    agg = jnp.sum(z * w, axis=1)                                         # (BN, H)
    o_ref[...] = jnp.maximum(agg, 0.0)                                   # activation = ReLU


def reduce_attn(self_h, z, m, a):
    N, M, H = z.shape
    BN, Np = _node_tiling(N)
    out = pl.pallas_call(
        _reduce_attn_kernel,
        out_shape=jax.ShapeDtypeStruct((Np, H), jnp.float32),
        grid=(Np // BN,),
        in_specs=[
            pl.BlockSpec((BN, H), lambda i: (i, 0)),
            pl.BlockSpec((BN, M, H), lambda i: (i, 0, 0)),
            pl.BlockSpec((BN, M, H), lambda i: (i, 0, 0)),
            pl.BlockSpec((1, 2 * H), lambda i: (0, 0)),
        ],
        out_specs=pl.BlockSpec((BN, H), lambda i: (i, 0)),
        compiler_params=pltpu.CompilerParams(
            dimension_semantics=("parallel",),
            vmem_limit_bytes=_VMEM_LIMIT,
        ),
    )(_pad_nodes(self_h, Np), _pad_nodes(z, Np), _pad_nodes(m, Np), a)
    return out[:N]


# ----------------------------------------------------------------------------
# Layer / model glue
# ----------------------------------------------------------------------------
def graph_align_layer(h, neigh, W, b, a, attn):
    """One smallGraphAlignLayer.

    h:     (N, in_feats)
    neigh: (2R, N, K) int32 — K neighbors per node per edge type (edge_indices)
    W:     (2R+1, in_feats, H), b: (2R+1, H)   — rel_layers[i].linear
    a:     (1, 2H)                             — shared self_attn weight
    """
    R2, N, K = neigh.shape
    H = W.shape[-1]

    proj = project_all(h, W, b)                    # (N, (2R+1)*H)  fused Pallas matmul
    self_h = proj[:, :H]                           # (N, H)
    proj_rel = proj[:, H:].reshape(N, R2, H)       # (N, 2R, H)

    # TODO(synk): fuse this data-dependent gather into the reduce kernels
    # (scalar-prefetch neigh + per-block DMA) so z/m never round-trip HBM.
    ridx = jnp.arange(R2)[:, None, None]
    z = proj_rel[neigh, ridx]                      # (2R, N, K, H): Linear_{r+1}(h[neigh_r])
    z = jnp.transpose(z, (1, 0, 2, 3)).reshape(N, R2 * K, H)

    if attn:
        # attn messages sent along edge_indices[-i-1]: edge set r pairs with Linear_{2R-r}
        m = proj_rel[neigh, (R2 - 1) - ridx]
        m = jnp.transpose(m, (1, 0, 2, 3)).reshape(N, R2 * K, H)
        agg = reduce_attn(self_h, z, m, a)         # (N, H)
    else:
        agg = reduce_mean(z)                       # (N, H)

    # activation(cat[self_h, agg]); ReLU is elementwise so apply per half and concat.
    return jnp.concatenate([jnp.maximum(self_h, 0.0), agg], axis=-1)


@jax.jit
def small_graph_align_net(feat, neigh, params):
    h = feat
    L = len(params)
    for i, p in enumerate(params):
        h = graph_align_layer(h, neigh, p["W"], p["b"], p["a"], attn=(i == L - 1))
    return h


# ----------------------------------------------------------------------------
# Deterministic parameter / input construction + run
# ----------------------------------------------------------------------------
def init_params(key, in_feats, n_hidden, n_layers, num_rels):
    params = []
    dims = [in_feats] + [2 * n_hidden] * n_layers
    for in_dim in dims:
        k1, k2, k3, key = jax.random.split(key, 4)
        R1 = 2 * num_rels + 1
        W = 0.1 * jax.random.normal(k1, (R1, in_dim, n_hidden), jnp.float32)
        b = 0.1 * jax.random.normal(k2, (R1, n_hidden), jnp.float32)
        a = 0.1 * jax.random.normal(k3, (1, 2 * n_hidden), jnp.float32)
        params.append({"W": W, "b": b, "a": a})
    return params


if __name__ == "__main__":
    # small shapes consistent with the module
    N = 8            # nodes
    in_feats = 32
    n_hidden = 32
    n_layers = 1     # -> 2 smallGraphAlignLayers total, last one with attn=True
    num_rels = 2     # num_rel_1 -> 2*num_rels = 4 edge types, 5 linears per layer
    K = 2            # neighbors per node per edge type

    key = jax.random.PRNGKey(0)
    kf, kn, kp = jax.random.split(key, 3)

    feat = 0.5 * jax.random.normal(kf, (N, in_feats), jnp.float32)         # g.ndata['features']
    neigh = jax.random.randint(kn, (2 * num_rels, N, K), 0, N, jnp.int32)  # dense edge_indices
    params = init_params(kp, in_feats, n_hidden, n_layers, num_rels)

    out = small_graph_align_net(feat, neigh, params)
    out = jax.block_until_ready(out)
    assert out.shape == (N, 2 * n_hidden)
    assert bool(jnp.all(jnp.isfinite(out)))
    print("KERNEL_OK")
</pallas_src>

<mosaic_0001>
module attributes {stable_mosaic.version = 11 : i64} {
  func.func @_project_kernel(%arg0: i32, %arg1: memref<8x32xbf16, #tpu.memory_space<vmem>>, %arg2: memref<32x160xbf16, #tpu.memory_space<vmem>>, %arg3: memref<1x160xf32, #tpu.memory_space<vmem>>, %arg4: memref<8x160xf32, #tpu.memory_space<vmem>>) attributes {dimension_semantics = [#tpu.dimension_semantics<parallel>], iteration_bounds = array<i64: 1>, scalar_prefetch = 0 : i64, scratch_operands = 0 : i64, tpu.core_type = #tpu.core_type<tc>, window_params = [{transform_indices = @transform_0, window_bounds = array<i64: 8, 32>}, {pipeline_mode = #tpu.pipeline_mode<synchronous>, transform_indices = @transform_1, window_bounds = array<i64: 32, 160>}, {pipeline_mode = #tpu.pipeline_mode<synchronous>, transform_indices = @transform_2, window_bounds = array<i64: 1, 160>}, {transform_indices = @transform_3, window_bounds = array<i64: 8, 160>}]} {
    %c0 = arith.constant 0 : index
    %c0_0 = arith.constant 0 : index
    %0 = vector.load %arg1[%c0, %c0_0] : memref<8x32xbf16, #tpu.memory_space<vmem>>, vector<8x32xbf16>
    %c0_1 = arith.constant 0 : index
    %c0_2 = arith.constant 0 : index
    %1 = vector.load %arg2[%c0_1, %c0_2] : memref<32x160xbf16, #tpu.memory_space<vmem>>, vector<32x160xbf16>
    %cst = arith.constant dense<0.000000e+00> : vector<8x160xf32>
    %2 = tpu.matmul %0, %1, %cst {dimension_numbers = #tpu.dot_dimension_numbers<[1], [0], [0], [1], [0, 0, 1, 1], [], []>} : vector<8x32xbf16>, vector<32x160xbf16>, vector<8x160xf32> -> vector<8x160xf32>
    %c0_3 = arith.constant 0 : index
    %c0_4 = arith.constant 0 : index
    %3 = vector.load %arg3[%c0_3, %c0_4] : memref<1x160xf32, #tpu.memory_space<vmem>>, vector<1x160xf32>
    %4 = vector.broadcast %3 : vector<1x160xf32> to vector<8x160xf32>
    %5 = arith.addf %2, %4 : vector<8x160xf32>
    %c0_5 = arith.constant 0 : index
    %c0_6 = arith.constant 0 : index
    %6 = vector.load %arg4[%c0_5, %c0_6] : memref<8x160xf32, #tpu.memory_space<vmem>>, vector<8x160xf32>
    tpu.vector_store %arg4[%c0_5, %c0_6], %5 {strides = array<i32>} : memref<8x160xf32, #tpu.memory_space<vmem>>, vector<8x160xf32>,
    return
  }
  func.func @transform_0(%arg0: i32) -> (i32, i32) {
    %c0_i32 = arith.constant 0 : i32
    %c0_i32_0 = arith.constant 0 : i32
    return %arg0, %c0_i32 : i32, i32
  }
  func.func @transform_1(%arg0: i32) -> (i32, i32) {
    %c0_i32 = arith.constant 0 : i32
    %c0_i32_0 = arith.constant 0 : i32
    %c0_i32_1 = arith.constant 0 : i32
    return %c0_i32, %c0_i32_0 : i32, i32
  }
  func.func @transform_2(%arg0: i32) -> (i32, i32) {
    %c0_i32 = arith.constant 0 : i32
    %c0_i32_0 = arith.constant 0 : i32
    %c0_i32_1 = arith.constant 0 : i32
    return %c0_i32, %c0_i32_0 : i32, i32
  }
  func.func @transform_3(%arg0: i32) -> (i32, i32) {
    %c0_i32 = arith.constant 0 : i32
    %c0_i32_0 = arith.constant 0 : i32
    return %arg0, %c0_i32 : i32, i32
  }
}

module attributes {stable_mosaic.version = 11 : i64} {
  func.func @_reduce_mean_kernel(%arg0: i32, %arg1: memref<8x8x32xf32, #tpu.memory_space<vmem>>, %arg2: memref<8x32xf32, #tpu.memory_space<vmem>>) attributes {dimension_semantics = [#tpu.dimension_semantics<parallel>], iteration_bounds = array<i64: 1>, scalar_prefetch = 0 : i64, scratch_operands = 0 : i64, tpu.core_type = #tpu.core_type<tc>, window_params = [{transform_indices = @transform_0, window_bounds = array<i64: 8, 8, 32>}, {transform_indices = @transform_1, window_bounds = array<i64: 8, 32>}]} {
    %c0 = arith.constant 0 : index
    %c0_0 = arith.constant 0 : index
    %c0_1 = arith.constant 0 : index
    %0 = vector.load %arg1[%c0, %c0_0, %c0_1] : memref<8x8x32xf32, #tpu.memory_space<vmem>>, vector<8x8x32xf32>
    %cst = arith.constant dense<0.000000e+00> : vector<8x32xf32>
    %1 = vector.multi_reduction <add>, %0, %cst [1] : vector<8x8x32xf32> to vector<8x32xf32>
    %cst_2 = arith.constant 8.000000e+00 : f32
    %2 = vector.broadcast %cst_2 : f32 to vector<8x32xf32>
    %3 = arith.divf %1, %2 : vector<8x32xf32>
    %cst_3 = arith.constant 0.000000e+00 : f32
    %4 = vector.broadcast %cst_3 : f32 to vector<8x32xf32>
    %5 = arith.maximumf %3, %4 : vector<8x32xf32>
    %c0_4 = arith.constant 0 : index
    %c0_5 = arith.constant 0 : index
    %6 = vector.load %arg2[%c0_4, %c0_5] : memref<8x32xf32, #tpu.memory_space<vmem>>, vector<8x32xf32>
    tpu.vector_store %arg2[%c0_4, %c0_5], %5 {strides = array<i32>} : memref<8x32xf32, #tpu.memory_space<vmem>>, vector<8x32xf32>,
    return
  }
  func.func @transform_0(%arg0: i32) -> (i32, i32, i32) {
    %c0_i32 = arith.constant 0 : i32
    %c0_i32_0 = arith.constant 0 : i32
    %c0_i32_1 = arith.constant 0 : i32
    return %arg0, %c0_i32, %c0_i32_0 : i32, i32, i32
  }
  func.func @transform_1(%arg0: i32) -> (i32, i32) {
    %c0_i32 = arith.constant 0 : i32
    %c0_i32_0 = arith.constant 0 : i32
    return %arg0, %c0_i32 : i32, i32
  }
}

module attributes {stable_mosaic.version = 11 : i64} {
  func.func @_project_kernel(%arg0: i32, %arg1: memref<8x64xbf16, #tpu.memory_space<vmem>>, %arg2: memref<64x160xbf16, #tpu.memory_space<vmem>>, %arg3: memref<1x160xf32, #tpu.memory_space<vmem>>, %arg4: memref<8x160xf32, #tpu.memory_space<vmem>>) attributes {dimension_semantics = [#tpu.dimension_semantics<parallel>], iteration_bounds = array<i64: 1>, scalar_prefetch = 0 : i64, scratch_operands = 0 : i64, tpu.core_type = #tpu.core_type<tc>, window_params = [{transform_indices = @transform_0, window_bounds = array<i64: 8, 64>}, {pipeline_mode = #tpu.pipeline_mode<synchronous>, transform_indices = @transform_1, window_bounds = array<i64: 64, 160>}, {pipeline_mode = #tpu.pipeline_mode<synchronous>, transform_indices = @transform_2, window_bounds = array<i64: 1, 160>}, {transform_indices = @transform_3, window_bounds = array<i64: 8, 160>}]} {
    %c0 = arith.constant 0 : index
    %c0_0 = arith.constant 0 : index
    %0 = vector.load %arg1[%c0, %c0_0] : memref<8x64xbf16, #tpu.memory_space<vmem>>, vector<8x64xbf16>
    %c0_1 = arith.constant 0 : index
    %c0_2 = arith.constant 0 : index
    %1 = vector.load %arg2[%c0_1, %c0_2] : memref<64x160xbf16, #tpu.memory_space<vmem>>, vector<64x160xbf16>
    %cst = arith.constant dense<0.000000e+00> : vector<8x160xf32>
    %2 = tpu.matmul %0, %1, %cst {dimension_numbers = #tpu.dot_dimension_numbers<[1], [0], [0], [1], [0, 0, 1, 1], [], []>} : vector<8x64xbf16>, vector<64x160xbf16>, vector<8x160xf32> -> vector<8x160xf32>
    %c0_3 = arith.constant 0 : index
    %c0_4 = arith.constant 0 : index
    %3 = vector.load %arg3[%c0_3, %c0_4] : memref<1x160xf32, #tpu.memory_space<vmem>>, vector<1x160xf32>
    %4 = vector.broadcast %3 : vector<1x160xf32> to vector<8x160xf32>
    %5 = arith.addf %2, %4 : vector<8x160xf32>
    %c0_5 = arith.constant 0 : index
    %c0_6 = arith.constant 0 : index
    %6 = vector.load %arg4[%c0_5, %c0_6] : memref<8x160xf32, #tpu.memory_space<vmem>>, vector<8x160xf32>
    tpu.vector_store %arg4[%c0_5, %c0_6], %5 {strides = array<i32>} : memref<8x160xf32, #tpu.memory_space<vmem>>, vector<8x160xf32>,
    return
  }
  func.func @transform_0(%arg0: i32) -> (i32, i32) {
    %c0_i32 = arith.constant 0 : i32
    %c0_i32_0 = arith.constant 0 : i32
    return %arg0, %c0_i32 : i32, i32
  }
  func.func @transform_1(%arg0: i32) -> (i32, i32) {
    %c0_i32 = arith.constant 0 : i32
    %c0_i32_0 = arith.constant 0 : i32
    %c0_i32_1 = arith.constant 0 : i32
    return %c0_i32, %c0_i32_0 : i32, i32
  }
  func.func @transform_2(%arg0: i32) -> (i32, i32) {
    %c0_i32 = arith.constant 0 : i32
    %c0_i32_0 = arith.constant 0 : i32
    %c0_i32_1 = arith.constant 0 : i32
    return %c0_i32, %c0_i32_0 : i32, i32
  }
  func.func @transform_3(%arg0: i32) -> (i32, i32) {
    %c0_i32 = arith.constant 0 : i32
    %c0_i32_0 = arith.constant 0 : i32
    return %arg0, %c0_i32 : i32, i32
  }
}

module attributes {stable_mosaic.version = 11 : i64} {
  func.func @_reduce_attn_kernel(%arg0: i32, %arg1: memref<8x32xf32, #tpu.memory_space<vmem>>, %arg2: memref<8x8x32xf32, #tpu.memory_space<vmem>>, %arg3: memref<8x8x32xf32, #tpu.memory_space<vmem>>, %arg4: memref<1x64xf32, #tpu.memory_space<vmem>>, %arg5: memref<8x32xf32, #tpu.memory_space<vmem>>) attributes {dimension_semantics = [#tpu.dimension_semantics<parallel>], iteration_bounds = array<i64: 1>, scalar_prefetch = 0 : i64, scratch_operands = 0 : i64, tpu.core_type = #tpu.core_type<tc>, window_params = [{transform_indices = @transform_0, window_bounds = array<i64: 8, 32>}, {transform_indices = @transform_1, window_bounds = array<i64: 8, 8, 32>}, {transform_indices = @transform_2, window_bounds = array<i64: 8, 8, 32>}, {pipeline_mode = #tpu.pipeline_mode<synchronous>, transform_indices = @transform_3, window_bounds = array<i64: 1, 64>}, {transform_indices = @transform_4, window_bounds = array<i64: 8, 32>}]} {
    %c0 = arith.constant 0 : index
    %c0_0 = arith.constant 0 : index
    %0 = vector.load %arg1[%c0, %c0_0] : memref<8x32xf32, #tpu.memory_space<vmem>>, vector<8x32xf32>
    %c0_1 = arith.constant 0 : index
    %c0_2 = arith.constant 0 : index
    %c0_3 = arith.constant 0 : index
    %1 = vector.load %arg2[%c0_1, %c0_2, %c0_3] : memref<8x8x32xf32, #tpu.memory_space<vmem>>, vector<8x8x32xf32>
    %c0_4 = arith.constant 0 : index
    %c0_5 = arith.constant 0 : index
    %c0_6 = arith.constant 0 : index
    %2 = vector.load %arg3[%c0_4, %c0_5, %c0_6] : memref<8x8x32xf32, #tpu.memory_space<vmem>>, vector<8x8x32xf32>
    %c0_7 = arith.constant 0 : index
    %c0_8 = arith.constant 0 : index
    %3 = vector.load %arg4[%c0_7, %c0_8] : memref<1x64xf32, #tpu.memory_space<vmem>>, vector<1x32xf32>
    %c0_9 = arith.constant 0 : index
    %c32 = arith.constant 32 : index
    %4 = vector.load %arg4[%c0_9, %c32] : memref<1x64xf32, #tpu.memory_space<vmem>>, vector<1x32xf32>
    %5 = vector.shape_cast %3 : vector<1x32xf32> to vector<1x1x32xf32>
    %6 = vector.broadcast %5 : vector<1x1x32xf32> to vector<8x8x32xf32>
    %7 = arith.mulf %1, %6 : vector<8x8x32xf32>
    %cst = arith.constant dense<0.000000e+00> : vector<8x8xf32>
    %8 = vector.multi_reduction <add>, %7, %cst [2] : vector<8x8x32xf32> to vector<8x8xf32>
    %9 = vector.shape_cast %8 : vector<8x8xf32> to vector<8x8x1xf32>
    %10 = vector.broadcast %4 : vector<1x32xf32> to vector<8x32xf32>
    %11 = arith.mulf %0, %10 : vector<8x32xf32>
    %cst_10 = arith.constant dense<0.000000e+00> : vector<8xf32>
    %12 = vector.multi_reduction <add>, %11, %cst_10 [1] : vector<8x32xf32> to vector<8xf32>
    %13 = vector.shape_cast %12 : vector<8xf32> to vector<8x1xf32>
    %14 = vector.shape_cast %13 : vector<8x1xf32> to vector<8x1x1xf32>
    %15 = vector.broadcast %14 : vector<8x1x1xf32> to vector<8x8x1xf32>
    %16 = arith.addf %9, %15 : vector<8x8x1xf32>
    %cst_11 = arith.constant 0.000000e+00 : f32
    %17 = vector.broadcast %cst_11 : f32 to vector<8x8x1xf32>
    %18 = arith.cmpf ogt, %16, %17 : vector<8x8x1xf32>
    %cst_12 = arith.constant 0.00999999977 : f32
    %19 = vector.broadcast %cst_12 : f32 to vector<8x8x1xf32>
    %20 = arith.mulf %19, %16 : vector<8x8x1xf32>
    %21 = arith.select %18, %16, %20 : vector<8x8x1xi1>, vector<8x8x1xf32>
    %22 = arith.mulf %1, %1 : vector<8x8x32xf32>
    %cst_13 = arith.constant dense<0.000000e+00> : vector<8x8xf32>
    %23 = vector.multi_reduction <add>, %22, %cst_13 [2] : vector<8x8x32xf32> to vector<8x8xf32>
    %24 = vector.shape_cast %23 : vector<8x8xf32> to vector<8x8x1xf32>
    %25 = arith.mulf %2, %2 : vector<8x8x32xf32>
    %cst_14 = arith.constant dense<0.000000e+00> : vector<8x8xf32>
    %26 = vector.multi_reduction <add>, %25, %cst_14 [2] : vector<8x8x32xf32> to vector<8x8xf32>
    %27 = vector.shape_cast %26 : vector<8x8xf32> to vector<8x1x8xf32>
    %28 = arith.truncf %1 : vector<8x8x32xf32> to vector<8x8x32xbf16>
    %29 = arith.truncf %2 : vector<8x8x32xf32> to vector<8x8x32xbf16>
    "tpu.trace_start"() <{level = 10 : i32, message = "bjh,bkh->bjk"}> : () -> ()
    %cst_15 = arith.constant dense<0.000000e+00> : vector<8x8x8xf32>
    %30 = tpu.matmul %28, %29, %cst_15 {dimension_numbers = #tpu.dot_dimension_numbers<[2], [2], [1], [1], [0, 0, 0, 1, 1, 1], [0], [0]>} : vector<8x8x32xbf16>, vector<8x8x32xbf16>, vector<8x8x8xf32> -> vector<8x8x8xf32>
    "tpu.trace_stop"() : () -> ()
    %31 = vector.broadcast %24 : vector<8x8x1xf32> to vector<8x8x8xf32>
    %32 = vector.broadcast %27 : vector<8x1x8xf32> to vector<8x8x8xf32>
    %33 = arith.addf %31, %32 : vector<8x8x8xf32>
    %cst_16 = arith.constant 2.000000e+00 : f32
    %34 = vector.broadcast %cst_16 : f32 to vector<8x8x8xf32>
    %35 = arith.mulf %34, %30 : vector<8x8x8xf32>
    %36 = arith.subf %33, %35 : vector<8x8x8xf32>
    %cst_17 = arith.constant 0.000000e+00 : f32
    %37 = vector.broadcast %cst_17 : f32 to vector<8x8x8xf32>
    %38 = arith.maximumf %36, %37 : vector<8x8x8xf32>
    %39 = math.sqrt %38 : vector<8x8x8xf32>
    %cst_18 = arith.constant 0.000000e+00 : f32
    %40 = vector.broadcast %cst_18 : f32 to vector<8x8x8xf32>
    %41 = arith.subf %40, %39 : vector<8x8x8xf32>
    %42 = math.exp %41 : vector<8x8x8xf32>
    %cst_19 = arith.constant dense<0.000000e+00> : vector<8x8xf32>
    %43 = vector.multi_reduction <add>, %2, %cst_19 [2] : vector<8x8x32xf32> to vector<8x8xf32>
    %cst_20 = arith.constant 0.000000e+00 : f32
    %44 = vector.broadcast %cst_20 : f32 to vector<8x8xf32>
    %45 = arith.cmpf one, %43, %44 : vector<8x8xf32>
    %46 = arith.extui %45 : vector<8x8xi1> to vector<8x8xi32>
    %47 = arith.sitofp %46 : vector<8x8xi32> to vector<8x8xf32>
    %48 = vector.shape_cast %47 : vector<8x8xf32> to vector<8x1x8xf32>
    %49 = vector.broadcast %48 : vector<8x1x8xf32> to vector<8x8x8xf32>
    %50 = arith.mulf %42, %49 : vector<8x8x8xf32>
    %cst_21 = arith.constant dense<0.000000e+00> : vector<8x8xf32>
    %51 = vector.multi_reduction <add>, %50, %cst_21 [2] : vector<8x8x8xf32> to vector<8x8xf32>
    %52 = vector.shape_cast %51 : vector<8x8xf32> to vector<8x8x1xf32>
    %cst_22 = arith.constant dense<0xFF800000> : vector<8x1xf32>
    %53 = vector.multi_reduction <maximumf>, %21, %cst_22 [1] : vector<8x8x1xf32> to vector<8x1xf32>
    %54 = vector.shape_cast %53 : vector<8x1xf32> to vector<8x1x1xf32>
    %55 = vector.broadcast %54 : vector<8x1x1xf32> to vector<8x8x1xf32>
    %56 = arith.subf %21, %55 : vector<8x8x1xf32>
    %57 = math.exp %56 : vector<8x8x1xf32>
    %58 = arith.mulf %52, %57 : vector<8x8x1xf32>
    %cst_23 = arith.constant dense<0.000000e+00> : vector<8x1xf32>
    %59 = vector.multi_reduction <add>, %58, %cst_23 [1] : vector<8x8x1xf32> to vector<8x1xf32>
    %60 = vector.shape_cast %59 : vector<8x1xf32> to vector<8x1x1xf32>
    %61 = tpu.reciprocal %60 {approx = true} : vector<8x1x1xf32> -> vector<8x1x1xf32>
    %62 = vector.broadcast %61 : vector<8x1x1xf32> to vector<8x8x1xf32>
    %63 = arith.mulf %58, %62 : vector<8x8x1xf32>
    %64 = vector.broadcast %63 : vector<8x8x1xf32> to vector<8x8x32xf32>
    %65 = arith.mulf %1, %64 : vector<8x8x32xf32>
    %cst_24 = arith.constant dense<0.000000e+00> : vector<8x32xf32>
    %66 = vector.multi_reduction <add>, %65, %cst_24 [1] : vector<8x8x32xf32> to vector<8x32xf32>
    %cst_25 = arith.constant 0.000000e+00 : f32
    %67 = vector.broadcast %cst_25 : f32 to vector<8x32xf32>
    %68 = arith.maximumf %66, %67 : vector<8x32xf32>
    %c0_26 = arith.constant 0 : index
    %c0_27 = arith.constant 0 : index
    %69 = vector.load %arg5[%c0_26, %c0_27] : memref<8x32xf32, #tpu.memory_space<vmem>>, vector<8x32xf32>
    tpu.vector_store %arg5[%c0_26, %c0_27], %68 {strides = array<i32>} : memref<8x32xf32, #tpu.memory_space<vmem>>, vector<8x32xf32>,
    return
  }
  func.func @transform_0(%arg0: i32) -> (i32, i32) {
    %c0_i32 = arith.constant 0 : i32
    %c0_i32_0 = arith.constant 0 : i32
    return %arg0, %c0_i32 : i32, i32
  }
  func.func @transform_1(%arg0: i32) -> (i32, i32, i32) {
    %c0_i32 = arith.constant 0 : i32
    %c0_i32_0 = arith.constant 0 : i32
    %c0_i32_1 = arith.constant 0 : i32
    return %arg0, %c0_i32, %c0_i32_0 : i32, i32, i32
  }
  func.func @transform_2(%arg0: i32) -> (i32, i32, i32) {
    %c0_i32 = arith.constant 0 : i32
    %c0_i32_0 = arith.constant 0 : i32
    %c0_i32_1 = arith.constant 0 : i32
    return %arg0, %c0_i32, %c0_i32_0 : i32, i32, i32
  }
  func.func @transform_3(%arg0: i32) -> (i32, i32) {
    %c0_i32 = arith.constant 0 : i32
    %c0_i32_0 = arith.constant 0 : i32
    %c0_i32_1 = arith.constant 0 : i32
    return %c0_i32, %c0_i32_0 : i32, i32
  }
  func.func @transform_4(%arg0: i32) -> (i32, i32) {
    %c0_i32 = arith.constant 0 : i32
    %c0_i32_0 = arith.constant 0 : i32
    return %arg0, %c0_i32 : i32, i32
  }
}

</mosaic_0001>

<llo_original>
// kernel: small_graph_align_net.5
$region0: #{small_graph_align_net.5}
  #allocation0 [shape = 'u32[]', space=smem, size = 0x4, offset = 0x4, fixed_abs, tag = 'smem constant byte address 0x4 - core index']
  #allocation1 [shape = 'u32[144,128]{1,0:T(1,128)}', space=vmem, size = 0x12000, scoped, tag = 'internal scratch']
  %s0 = inlined_call_operand.vmem [shape: f32[8,8,32], index: 0, kind: input, shape index: {}]
  %s1 = inlined_call_operand.vmem [shape: f32[8,32], index: 1, kind: output, shape index: {}]
  %s2 = sld [smem:[#allocation0]]
  $region14: #{small_graph_align_net.5} parent=0
    _
  %s4 = ssub.s32 1, %s2
  %s5 = scalar_select 0, %s4, %s2
  // Predicated region
  $region2: #{small_graph_align_net.5} parent=0 // pred_check
    _
  $region3: #{small_graph_align_net.5} parent=0 // pred_check_branch
    %7 = sbr.rel (0) target = $region5
  $region4: #{small_graph_align_net.5} parent=0 // pred_region
    _
  $region5: #{small_graph_align_net.5} parent=0 // pred_fallthru
    _
  %v8 = vld [vmem:[%s0] sm:$0xff]
  %v9 = vld [vmem:[%s0 + $0x8] sm:$0xff]
  %v10 = vld [vmem:[%s0 + $0x10] sm:$0xff]
  %v11 = vld [vmem:[%s0 + $0x18] sm:$0xff]
  %v12 = vld [vmem:[%s0 + $0x20] sm:$0xff]
  %v13 = vld [vmem:[%s0 + $0x28] sm:$0xff]
  %v14 = vld [vmem:[%s0 + $0x30] sm:$0xff]
  %v15 = vld [vmem:[%s0 + $0x38] sm:$0xff]
  %vm16 = vcmask 261120
  %v17 = vsel %vm16, %v8, 0.0
  %v18 = vrot.slane %v17, 4
  %v19 = vadd.f32 %v17, %v18
  %v20 = vrot.slane %v19, 2
  %v21 = vadd.f32 %v19, %v20
  %v22 = vrot.slane %v21, 1
  %v23 = vadd.f32 %v21, %v22
  %v24 = vsel %vm16, %v9, 0.0
  %v25 = vrot.slane %v24, 4
  %v26 = vadd.f32 %v24, %v25
  %v27 = vrot.slane %v26, 2
  %v28 = vadd.f32 %v26, %v27
  %v29 = vrot.slane %v28, 1
  %v30 = vadd.f32 %v28, %v29
  %v31 = vsel %vm16, %v10, 0.0
  %v32 = vrot.slane %v31, 4
  %v33 = vadd.f32 %v31, %v32
  %v34 = vrot.slane %v33, 2
  %v35 = vadd.f32 %v33, %v34
  %v36 = vrot.slane %v35, 1
  %v37 = vadd.f32 %v35, %v36
  %v38 = vsel %vm16, %v11, 0.0
  %v39 = vrot.slane %v38, 4
  %v40 = vadd.f32 %v38, %v39
  %v41 = vrot.slane %v40, 2
  %v42 = vadd.f32 %v40, %v41
  %v43 = vrot.slane %v42, 1
  %v44 = vadd.f32 %v42, %v43
  %v45 = vsel %vm16, %v12, 0.0
  %v46 = vrot.slane %v45, 4
  %v47 = vadd.f32 %v45, %v46
  %v48 = vrot.slane %v47, 2
  %v49 = vadd.f32 %v47, %v48
  %v50 = vrot.slane %v49, 1
  %v51 = vadd.f32 %v49, %v50
  %v52 = vsel %vm16, %v13, 0.0
  %v53 = vrot.slane %v52, 4
  %v54 = vadd.f32 %v52, %v53
  %v55 = vrot.slane %v54, 2
  %v56 = vadd.f32 %v54, %v55
  %v57 = vrot.slane %v56, 1
  %v58 = vadd.f32 %v56, %v57
  %v59 = vsel %vm16, %v14, 0.0
  %v60 = vrot.slane %v59, 4
  %v61 = vadd.f32 %v59, %v60
  %v62 = vrot.slane %v61, 2
  %v63 = vadd.f32 %v61, %v62
  %v64 = vrot.slane %v63, 1
  %v65 = vadd.f32 %v63, %v64
  %v66 = vsel %vm16, %v15, 0.0
  %v67 = vrot.slane %v66, 4
  %v68 = vadd.f32 %v66, %v67
  %v69 = vrot.slane %v68, 2
  %v70 = vadd.f32 %v68, %v69
  %v71 = vrot.slane %v70, 1
  %v72 = vadd.f32 %v70, %v71
  %v73 = vrcp.pop 8.0
  %v74 = vmul.f32 %v23, %v73
  %v75 = vmul.f32 %v30, %v73
  %v76 = vmul.f32 %v37, %v73
  %v77 = vmul.f32 %v44, %v73
  %v78 = vmul.f32 %v51, %v73
  %v79 = vmul.f32 %v58, %v73
  %v80 = vmul.f32 %v65, %v73
  %v81 = vmul.f32 %v72, %v73
  %v82 = vmax.f32 %v74, 0.0
  %v83 = vmax.f32 %v75, 0.0
  %v84 = vmax.f32 %v76, 0.0
  %v85 = vmax.f32 %v77, 0.0
  %v86 = vmax.f32 %v78, 0.0
  %v87 = vmax.f32 %v79, 0.0
  %v88 = vmax.f32 %v80, 0.0
  %v89 = vmax.f32 %v81, 0.0
  %vm98 = vcmask 1041409
  %v99 = vsel %vm98, %v83, %v82
  %vm100 = vcmask 1042434
  %v101 = vsel %vm100, %v84, %v99
  %vm102 = vcmask 1043459
  %v103 = vsel %vm102, %v85, %v101
  %vm104 = vcmask 1044484
  %v105 = vsel %vm104, %v86, %v103
  %vm106 = vcmask 1045509
  %v107 = vsel %vm106, %v87, %v105
  %vm108 = vcmask 1046534
  %v109 = vsel %vm108, %v88, %v107
  %vm110 = vcmask 1047559
  %v111 = vsel %vm110, %v89, %v109
  %113 = vst.msk [vmem:[%s1] sm:$0xff] %vm16, %v111
  // Predicated region
  $region6: #{small_graph_align_net.5} parent=0 // pred_check
    _
  $region7: #{small_graph_align_net.5} parent=0 // pred_check_branch
    %115 = sbr.rel (0) target = $region9
  $region8: #{small_graph_align_net.5} parent=0 // pred_region
    _
  $region9: #{small_graph_align_net.5} parent=0 // pred_fallthru
    _
  // Predicated region
  $region10: #{small_graph_align_net.5} parent=0 // pred_check
    _
  $region11: #{small_graph_align_net.5} parent=0 // pred_check_branch
    %117 = sbr.rel (0) target = $region13
  $region12: #{small_graph_align_net.5} parent=0 // pred_region
    _
  $region13: #{small_graph_align_net.5} parent=0 // pred_fallthru
    _

// kernel: small_graph_align_net.4
$region0: #{small_graph_align_net.4}
  #allocation0 [shape = 'u32[]', space=smem, size = 0x4, offset = 0x4, fixed_abs, tag = 'smem constant byte address 0x4 - core index']
  #allocation1 [shape = 'u32[144,128]{1,0:T(1,128)}', space=vmem, size = 0x12000, scoped, tag = 'internal scratch']
  %s0 = inlined_call_operand.vmem [shape: bf16[8,32], index: 0, kind: input, shape index: {}]
  %s1 = inlined_call_operand.vmem [shape: bf16[32,160], index: 1, kind: input, shape index: {}]
  %s2 = inlined_call_operand.vmem [shape: f32[1,160], index: 2, kind: input, shape index: {}]
  %s3 = inlined_call_operand.vmem [shape: f32[8,160], index: 3, kind: output, shape index: {}]
  %s4 = sld [smem:[#allocation0]]
  $region22: #{small_graph_align_net.4} parent=0
    _
  %s6 = ssub.s32 1, %s4
  %s7 = scalar_select 0, %s6, %s4
  // Predicated region
  $region2: #{small_graph_align_net.4} parent=0 // pred_check
    _
  $region3: #{small_graph_align_net.4} parent=0 // pred_check_branch
    %9 = sbr.rel (0) target = $region5
  $region4: #{small_graph_align_net.4} parent=0 // pred_region
    _
  $region5: #{small_graph_align_net.4} parent=0 // pred_fallthru
    _
  // Predicated region
  $region6: #{small_graph_align_net.4} parent=0 // pred_check
    _
  $region7: #{small_graph_align_net.4} parent=0 // pred_check_branch
    %11 = sbr.rel (0) target = $region9
  $region8: #{small_graph_align_net.4} parent=0 // pred_region
    _
  $region9: #{small_graph_align_net.4} parent=0 // pred_fallthru
    _
  // Predicated region
  $region10: #{small_graph_align_net.4} parent=0 // pred_check
    _
  $region11: #{small_graph_align_net.4} parent=0 // pred_check_branch
    %13 = sbr.rel (0) target = $region13
  $region12: #{small_graph_align_net.4} parent=0 // pred_region
    _
  $region13: #{small_graph_align_net.4} parent=0 // pred_fallthru
    _
  %v15 = vld [vmem:[%s0] sm:$0xf]
  %v16 = vld [vmem:[%s1] sm:$0xff]
  %v17 = vld [vmem:[%s1 + $0x8] sm:$0xff]
  %v18 = vld [vmem:[%s1 + $0x10] sm:$0xff]
  %v19 = vld [vmem:[%s1 + $0x18] sm:$0xff]
  %v20 = vld [vmem:[%s2] sm:$0x3]
  %v22 = vlaneseq
  %v23 = vshrl.u32 %v22, 7
  %v24 = vsub.s32 0, %v23
  %v25 = vrot.slane %v20, %v24
  %v26 = vlaneseq
  %v27 = vshrl.u32 %v26, 7
  %v28 = vsub.s32 1, %v27
  %v29 = vrot.slane %v20, %v28
  %v36 = vunpack.c.l.b16 %v16
  %v37 = vunpack.c.h.b16 %v16
  %v38 = vunpack.c.l.b16 %v17
  %v39 = vunpack.c.h.b16 %v17
  %v40 = vunpack.c.l.b16 %v18
  %v41 = vunpack.c.h.b16 %v18
  %v42 = vunpack.c.l.b16 %v19
  %v43 = vunpack.c.h.b16 %v19
  %v44 = vpack.c.b16 %v38, %v36
  %v45 = vpack.c.b16 %v39, %v37
  %v46 = vpack.c.b16 %v42, %v40
  %v47 = vpack.c.b16 %v43, %v41
  %vm52 = vcmask 261120
  %v54 = vsel %vm52, %v15, 0
  %56 = vmatprep.subr.bf16.mxu0 0
  %57 = vmatpush1.bf16.msra.mxu0 0
  %58 = vmatprep.subr.bf16.mxu0 0
  %59 = vmatpush1.bf16.msra.mxu0 0
  %60 = vmatprep.subr.bf16.mxu0 0
  %61 = vmatpush1.bf16.msra.mxu0 0
  %62 = vmatprep.subr.bf16.mxu0 0
  %63 = vmatpush1.bf16.msra.mxu0 0
  %64 = vmatprep.subr.bf16.mxu0 0
  %65 = vmatpush1.bf16.msra.mxu0 0
  %66 = vmatprep.subr.bf16.mxu0 0
  %67 = vmatpush1.bf16.msra.mxu0 0
  %68 = vmatprep.subr.bf16.mxu0 %v47
  %69 = vmatpush1.bf16.msra.mxu0 %v46
  %70 = vmatprep.subr.bf16.mxu0 %v45
  %71 = vmatpush1.bf16.msra.mxu0 %v44
  %72 = vmatprep.subr.bf16.mxu0 0
  %73 = vmatpush2.bf16.msra.mxu0 0
  %74 = vmatprep.subr.bf16.mxu0 0
  %75 = vmatpush2.bf16.msra.mxu0 0
  %76 = vmatprep.subr.bf16.mxu0 0
  %77 = vmatpush2.bf16.msra.mxu0 0
  %78 = vmatprep.subr.bf16.mxu0 0
  %79 = vmatpush2.bf16.msra.mxu0 0
  %80 = vmatprep.subr.bf16.mxu0 0
  %81 = vmatpush2.bf16.msra.mxu0 0
  %82 = vmatprep.subr.bf16.mxu0 0
  %83 = vmatpush2.bf16.msra.mxu0 0
  %84 = vmatprep.subr.bf16.mxu0 0
  %85 = vmatpush2.bf16.msra.mxu0 0
  %86 = vmatprep.subr.bf16.mxu0 0
  %87 = vmatpush2.bf16.msra.mxu0 0
  %88 = vmatprep.mubr.bf16.mxu0 0
  %89 = vmatmul.mubr.bf16.gmra.mxu0 %v54
  %v90 = vpop.f32.mrf.mxu0
  %v91 = vadd.f32 %v25, %v90
  %v92 = vpop.f32.mrf.mxu0
  %v93 = vadd.f32 %v29, %v92
  %v94 = vpop.f32.mrf.mxu0
  %v95 = vpop.f32.mrf.mxu0
  %96 = vdwg.mxu0
  %97 = vst [vmem:[%s3] sm:$0xff] %v91
  %98 = vst.msk [vmem:[%s3 + $0x8] sm:$0xff] %vm52, %v93
  // Predicated region
  $region14: #{small_graph_align_net.4} parent=0 // pred_check
    _
  $region15: #{small_graph_align_net.4} parent=0 // pred_check_branch
    %100 = sbr.rel (0) target = $region17
  $region16: #{small_graph_align_net.4} parent=0 // pred_region
    _
  $region17: #{small_graph_align_net.4} parent=0 // pred_fallthru
    _
  // Predicated region
  $region18: #{small_graph_align_net.4} parent=0 // pred_check
    _
  $region19: #{small_graph_align_net.4} parent=0 // pred_check_branch
    %102 = sbr.rel (0) target = $region21
  $region20: #{small_graph_align_net.4} parent=0 // pred_region
    _
  $region21: #{small_graph_align_net.4} parent=0 // pred_fallthru
    _

// kernel: small_graph_align_net.6
$region0: #{small_graph_align_net.6}
  #allocation0 [shape = 'u32[]', space=smem, size = 0x4, offset = 0x4, fixed_abs, tag = 'smem constant byte address 0x4 - core index']
  #allocation1 [shape = 'u32[144,128]{1,0:T(1,128)}', space=vmem, size = 0x12000, scoped, tag = 'internal scratch']
  %s0 = inlined_call_operand.vmem [shape: bf16[8,64], index: 0, kind: input, shape index: {}]
  %s1 = inlined_call_operand.vmem [shape: bf16[64,160], index: 1, kind: input, shape index: {}]
  %s2 = inlined_call_operand.vmem [shape: f32[1,160], index: 2, kind: input, shape index: {}]
  %s3 = inlined_call_operand.vmem [shape: f32[8,160], index: 3, kind: output, shape index: {}]
  %s4 = sld [smem:[#allocation0]]
  $region22: #{small_graph_align_net.6} parent=0
    _
  %s6 = ssub.s32 1, %s4
  %s7 = scalar_select 0, %s6, %s4
  // Predicated region
  $region2: #{small_graph_align_net.6} parent=0 // pred_check
    _
  $region3: #{small_graph_align_net.6} parent=0 // pred_check_branch
    %9 = sbr.rel (0) target = $region5
  $region4: #{small_graph_align_net.6} parent=0 // pred_region
    _
  $region5: #{small_graph_align_net.6} parent=0 // pred_fallthru
    _
  // Predicated region
  $region6: #{small_graph_align_net.6} parent=0 // pred_check
    _
  $region7: #{small_graph_align_net.6} parent=0 // pred_check_branch
    %11 = sbr.rel (0) target = $region9
  $region8: #{small_graph_align_net.6} parent=0 // pred_region
    _
  $region9: #{small_graph_align_net.6} parent=0 // pred_fallthru
    _
  // Predicated region
  $region10: #{small_graph_align_net.6} parent=0 // pred_check
    _
  $region11: #{small_graph_align_net.6} parent=0 // pred_check_branch
    %13 = sbr.rel (0) target = $region13
  $region12: #{small_graph_align_net.6} parent=0 // pred_region
    _
  $region13: #{small_graph_align_net.6} parent=0 // pred_fallthru
    _
  %v15 = vld [vmem:[%s0] sm:$0xf]
  %v16 = vld [vmem:[%s1] sm:$0xff]
  %v17 = vld [vmem:[%s1 + $0x8] sm:$0xff]
  %v18 = vld [vmem:[%s1 + $0x10] sm:$0xff]
  %v19 = vld [vmem:[%s1 + $0x18] sm:$0xff]
  %v20 = vld [vmem:[%s1 + $0x20] sm:$0xff]
  %v21 = vld [vmem:[%s1 + $0x28] sm:$0xff]
  %v22 = vld [vmem:[%s1 + $0x30] sm:$0xff]
  %v23 = vld [vmem:[%s1 + $0x38] sm:$0xff]
  %v24 = vld [vmem:[%s2] sm:$0x3]
  %v26 = vlaneseq
  %v27 = vshrl.u32 %v26, 7
  %v28 = vsub.s32 0, %v27
  %v29 = vrot.slane %v24, %v28
  %v30 = vlaneseq
  %v31 = vshrl.u32 %v30, 7
  %v32 = vsub.s32 1, %v31
  %v33 = vrot.slane %v24, %v32
  %v44 = vunpack.c.l.b16 %v16
  %v45 = vunpack.c.h.b16 %v16
  %v46 = vunpack.c.l.b16 %v17
  %v47 = vunpack.c.h.b16 %v17
  %v48 = vunpack.c.l.b16 %v18
  %v49 = vunpack.c.h.b16 %v18
  %v50 = vunpack.c.l.b16 %v19
  %v51 = vunpack.c.h.b16 %v19
  %v52 = vunpack.c.l.b16 %v20
  %v53 = vunpack.c.h.b16 %v20
  %v54 = vunpack.c.l.b16 %v21
  %v55 = vunpack.c.h.b16 %v21
  %v56 = vunpack.c.l.b16 %v22
  %v57 = vunpack.c.h.b16 %v22
  %v58 = vunpack.c.l.b16 %v23
  %v59 = vunpack.c.h.b16 %v23
  %v60 = vpack.c.b16 %v46, %v44
  %v61 = vpack.c.b16 %v47, %v45
  %v62 = vpack.c.b16 %v50, %v48
  %v63 = vpack.c.b16 %v51, %v49
  %v64 = vpack.c.b16 %v54, %v52
  %v65 = vpack.c.b16 %v55, %v53
  %v66 = vpack.c.b16 %v58, %v56
  %v67 = vpack.c.b16 %v59, %v57
  %vm76 = vcmask 523264
  %v78 = vsel %vm76, %v15, 0
  %80 = vmatprep.subr.bf16.mxu0 0
  %81 = vmatpush1.bf16.msra.mxu0 0
  %82 = vmatprep.subr.bf16.mxu0 0
  %83 = vmatpush1.bf16.msra.mxu0 0
  %84 = vmatprep.subr.bf16.mxu0 0
  %85 = vmatpush1.bf16.msra.mxu0 0
  %86 = vmatprep.subr.bf16.mxu0 0
  %87 = vmatpush1.bf16.msra.mxu0 0
  %88 = vmatprep.subr.bf16.mxu0 %v67
  %89 = vmatpush1.bf16.msra.mxu0 %v66
  %90 = vmatprep.subr.bf16.mxu0 %v65
  %91 = vmatpush1.bf16.msra.mxu0 %v64
  %92 = vmatprep.subr.bf16.mxu0 %v63
  %93 = vmatpush1.bf16.msra.mxu0 %v62
  %94 = vmatprep.subr.bf16.mxu0 %v61
  %95 = vmatpush1.bf16.msra.mxu0 %v60
  %96 = vmatprep.subr.bf16.mxu0 0
  %97 = vmatpush2.bf16.msra.mxu0 0
  %98 = vmatprep.subr.bf16.mxu0 0
  %99 = vmatpush2.bf16.msra.mxu0 0
  %100 = vmatprep.subr.bf16.mxu0 0
  %101 = vmatpush2.bf16.msra.mxu0 0
  %102 = vmatprep.subr.bf16.mxu0 0
  %103 = vmatpush2.bf16.msra.mxu0 0
  %104 = vmatprep.subr.bf16.mxu0 0
  %105 = vmatpush2.bf16.msra.mxu0 0
  %106 = vmatprep.subr.bf16.mxu0 0
  %107 = vmatpush2.bf16.msra.mxu0 0
  %108 = vmatprep.subr.bf16.mxu0 0
  %109 = vmatpush2.bf16.msra.mxu0 0
  %110 = vmatprep.subr.bf16.mxu0 0
  %111 = vmatpush2.bf16.msra.mxu0 0
  %112 = vmatprep.mubr.bf16.mxu0 0
  %113 = vmatmul.mubr.bf16.gmra.mxu0 %v78
  %v114 = vpop.f32.mrf.mxu0
  %v115 = vadd.f32 %v29, %v114
  %v116 = vpop.f32.mrf.mxu0
  %v117 = vadd.f32 %v33, %v116
  %v118 = vpop.f32.mrf.mxu0
  %v119 = vpop.f32.mrf.mxu0
  %120 = vdwg.mxu0
  %121 = vst [vmem:[%s3] sm:$0xff] %v115
  %vm122 = vcmask 261120
  %123 = vst.msk [vmem:[%s3 + $0x8] sm:$0xff] %vm122, %v117
  // Predicated region
  $region14: #{small_graph_align_net.6} parent=0 // pred_check
    _
  $region15: #{small_graph_align_net.6} parent=0 // pred_check_branch
    %125 = sbr.rel (0) target = $region17
  $region16: #{small_graph_align_net.6} parent=0 // pred_region
    _
  $region17: #{small_graph_align_net.6} parent=0 // pred_fallthru
    _
  // Predicated region
  $region18: #{small_graph_align_net.6} parent=0 // pred_check
    _
  $region19: #{small_graph_align_net.6} parent=0 // pred_check_branch
    %127 = sbr.rel (0) target = $region21
  $region20: #{small_graph_align_net.6} parent=0 // pred_region
    _
  $region21: #{small_graph_align_net.6} parent=0 // pred_fallthru
    _

// kernel: small_graph_align_net.7
$region0: #{small_graph_align_net.7}
  #allocation0 [shape = 'u32[]', space=smem, size = 0x4, offset = 0x4, fixed_abs, tag = 'smem constant byte address 0x4 - core index']
  #allocation1 [shape = 'u32[144,128]{1,0:T(1,128)}', space=vmem, size = 0x12000, scoped, tag = 'internal scratch']
  %s0 = inlined_call_operand.vmem [shape: f32[8,32], index: 0, kind: input, shape index: {}]
  %s1 = inlined_call_operand.vmem [shape: f32[8,8,32], index: 1, kind: input, shape index: {}]
  %s2 = inlined_call_operand.vmem [shape: f32[8,8,32], index: 2, kind: input, shape index: {}]
  %s3 = inlined_call_operand.vmem [shape: f32[1,64], index: 3, kind: input, shape index: {}]
  %s4 = inlined_call_operand.vmem [shape: f32[8,32], index: 4, kind: output, shape index: {}]
  %s5 = sld [smem:[#allocation0]]
  $region26: #{small_graph_align_net.7} parent=0
    _
  %s7 = ssub.s32 1, %s5
  %s8 = scalar_select 0, %s7, %s5
  // Predicated region
  $region2: #{small_graph_align_net.7} parent=0 // pred_check
    _
  $region3: #{small_graph_align_net.7} parent=0 // pred_check_branch
    %10 = sbr.rel (0) target = $region5
  $region4: #{small_graph_align_net.7} parent=0 // pred_region
    _
  $region5: #{small_graph_align_net.7} parent=0 // pred_fallthru
    _
  // Predicated region
  $region6: #{small_graph_align_net.7} parent=0 // pred_check
    _
  $region7: #{small_graph_align_net.7} parent=0 // pred_check_branch
    %12 = sbr.rel (0) target = $region9
  $region8: #{small_graph_align_net.7} parent=0 // pred_region
    _
  $region9: #{small_graph_align_net.7} parent=0 // pred_fallthru
    _
  // Predicated region
  $region10: #{small_graph_align_net.7} parent=0 // pred_check
    _
  $region11: #{small_graph_align_net.7} parent=0 // pred_check_branch
    %14 = sbr.rel (0) target = $region13
  $region12: #{small_graph_align_net.7} parent=0 // pred_region
    _
  $region13: #{small_graph_align_net.7} parent=0 // pred_fallthru
    _
  // Predicated region
  $region14: #{small_graph_align_net.7} parent=0 // pred_check
    _
  $region15: #{small_graph_align_net.7} parent=0 // pred_check_branch
    %16 = sbr.rel (0) target = $region17
  $region16: #{small_graph_align_net.7} parent=0 // pred_region
    _
  $region17: #{small_graph_align_net.7} parent=0 // pred_fallthru
    _
  %v18 = vld [vmem:[%s0] sm:$0xff]
  %v19 = vld [vmem:[%s1] sm:$0xff]
  %v20 = vld [vmem:[%s1 + $0x8] sm:$0xff]
  %v21 = vld [vmem:[%s1 + $0x10] sm:$0xff]
  %v22 = vld [vmem:[%s1 + $0x18] sm:$0xff]
  %v23 = vld [vmem:[%s1 + $0x20] sm:$0xff]
  %v24 = vld [vmem:[%s1 + $0x28] sm:$0xff]
  %v25 = vld [vmem:[%s1 + $0x30] sm:$0xff]
  %v26 = vld [vmem:[%s1 + $0x38] sm:$0xff]
  %v27 = vld [vmem:[%s2] sm:$0xff]
  %v28 = vld [vmem:[%s2 + $0x8] sm:$0xff]
  %v29 = vld [vmem:[%s2 + $0x10] sm:$0xff]
  %v30 = vld [vmem:[%s2 + $0x18] sm:$0xff]
  %v31 = vld [vmem:[%s2 + $0x20] sm:$0xff]
  %v32 = vld [vmem:[%s2 + $0x28] sm:$0xff]
  %v33 = vld [vmem:[%s2 + $0x30] sm:$0xff]
  %v34 = vld [vmem:[%s2 + $0x38] sm:$0xff]
  %v35 = vld [vmem:[%s3] sm:$0x1]
  %v37 = vlaneseq
  %v38 = vshrl.u32 %v37, 7
  %v39 = vsub.s32 0, %v38
  %v40 = vrot.slane %v35, %v39
  %v42 = vmul.f32 %v19, %v40
  %v43 = vmul.f32 %v20, %v40
  %v44 = vmul.f32 %v21, %v40
  %v45 = vmul.f32 %v22, %v40
  %v46 = vmul.f32 %v23, %v40
  %v47 = vmul.f32 %v24, %v40
  %v48 = vmul.f32 %v25, %v40
  %v49 = vmul.f32 %v26, %v40
  %vm50 = vcmask 261120
  %v51 = vsel %vm50, %v42, 0.0
  %52 = vadd.xlane.f32.xlu0 %v51
  %v53 = vpop.xlane.xlu0 %52
  %v54 = vsel %vm50, %v43, 0.0
  %55 = vadd.xlane.f32.xlu0 %v54
  %v56 = vpop.xlane.xlu0 %55
  %v57 = vsel %vm50, %v44, 0.0
  %58 = vadd.xlane.f32.xlu0 %v57
  %v59 = vpop.xlane.xlu0 %58
  %v60 = vsel %vm50, %v45, 0.0
  %61 = vadd.xlane.f32.xlu0 %v60
  %v62 = vpop.xlane.xlu0 %61
  %v63 = vsel %vm50, %v46, 0.0
  %64 = vadd.xlane.f32.xlu0 %v63
  %v65 = vpop.xlane.xlu0 %64
  %v66 = vsel %vm50, %v47, 0.0
  %67 = vadd.xlane.f32.xlu0 %v66
  %v68 = vpop.xlane.xlu0 %67
  %v69 = vsel %vm50, %v48, 0.0
  %70 = vadd.xlane.f32.xlu0 %v69
  %v71 = vpop.xlane.xlu0 %70
  %v72 = vsel %vm50, %v49, 0.0
  %73 = vadd.xlane.f32.xlu0 %v72
  %v74 = vpop.xlane.xlu0 %73
  %75 = vrot.lane.b32.xlu0 %v40, 96
  %v76 = vpop.permute.xlu0 %75
  %v78 = vmul.f32 %v18, %v76
  %v79 = vsel %vm50, %v78, 0.0
  %80 = vadd.xlane.f32.xlu0 %v79
  %v81 = vpop.xlane.xlu0 %80
  %v83 = vlaneseq
  %v84 = vshrl.u32 %v83, 7
  %v85 = vsub.s32 0, %v84
  %v86 = vrot.slane %v81, %v85
  %v87 = vlaneseq
  %v88 = vshrl.u32 %v87, 7
  %v89 = vsub.s32 1, %v88
  %v90 = vrot.slane %v81, %v89
  %v91 = vlaneseq
  %v92 = vshrl.u32 %v91, 7
  %v93 = vsub.s32 2, %v92
  %v94 = vrot.slane %v81, %v93
  %v95 = vlaneseq
  %v96 = vshrl.u32 %v95, 7
  %v97 = vsub.s32 3, %v96
  %v98 = vrot.slane %v81, %v97
  %v99 = vlaneseq
  %v100 = vshrl.u32 %v99, 7
  %v101 = vsub.s32 4, %v100
  %v102 = vrot.slane %v81, %v101
  %v103 = vlaneseq
  %v104 = vshrl.u32 %v103, 7
  %v105 = vsub.s32 5, %v104
  %v106 = vrot.slane %v81, %v105
  %v107 = vlaneseq
  %v108 = vshrl.u32 %v107, 7
  %v109 = vsub.s32 6, %v108
  %v110 = vrot.slane %v81, %v109
  %v111 = vlaneseq
  %v112 = vshrl.u32 %v111, 7
  %v113 = vsub.s32 7, %v112
  %v114 = vrot.slane %v81, %v113
  %v123 = vadd.f32 %v53, %v86
  %v124 = vadd.f32 %v56, %v90
  %v125 = vadd.f32 %v59, %v94
  %v126 = vadd.f32 %v62, %v98
  %v127 = vadd.f32 %v65, %v102
  %v128 = vadd.f32 %v68, %v106
  %v129 = vadd.f32 %v71, %v110
  %v130 = vadd.f32 %v74, %v114
  %vm131 = vcmp.gt.f32.partialorder %v123, 0.0
  %vm132 = vcmp.gt.f32.partialorder %v124, 0.0
  %vm133 = vcmp.gt.f32.partialorder %v125, 0.0
  %vm134 = vcmp.gt.f32.partialorder %v126, 0.0
  %vm135 = vcmp.gt.f32.partialorder %v127, 0.0
  %vm136 = vcmp.gt.f32.partialorder %v128, 0.0
  %vm137 = vcmp.gt.f32.partialorder %v129, 0.0
  %vm138 = vcmp.gt.f32.partialorder %v130, 0.0
  %v139 = vmul.f32 %v123, 0.01
  %v140 = vmul.f32 %v124, 0.01
  %v141 = vmul.f32 %v125, 0.01
  %v142 = vmul.f32 %v126, 0.01
  %v143 = vmul.f32 %v127, 0.01
  %v144 = vmul.f32 %v128, 0.01
  %v145 = vmul.f32 %v129, 0.01
  %v146 = vmul.f32 %v130, 0.01
  %v147 = vsel %vm131, %v123, %v139
  %v148 = vsel %vm132, %v124, %v140
  %v149 = vsel %vm133, %v125, %v141
  %v150 = vsel %vm134, %v126, %v142
  %v151 = vsel %vm135, %v127, %v143
  %v152 = vsel %vm136, %v128, %v144
  %v153 = vsel %vm137, %v129, %v145
  %v154 = vsel %vm138, %v130, %v146
  %v155 = vmul.f32 %v19, %v19
  %v156 = vmul.f32 %v20, %v20
  %v157 = vmul.f32 %v21, %v21
  %v158 = vmul.f32 %v22, %v22
  %v159 = vmul.f32 %v23, %v23
  %v160 = vmul.f32 %v24, %v24
  %v161 = vmul.f32 %v25, %v25
  %v162 = vmul.f32 %v26, %v26
  %v163 = vsel %vm50, %v155, 0.0
  %164 = vadd.xlane.f32.xlu0 %v163
  %v165 = vpop.xlane.xlu0 %164
  %v166 = vsel %vm50, %v156, 0.0
  %167 = vadd.xlane.f32.xlu0 %v166
  %v168 = vpop.xlane.xlu0 %167
  %v169 = vsel %vm50, %v157, 0.0
  %170 = vadd.xlane.f32.xlu0 %v169
  %v171 = vpop.xlane.xlu0 %170
  %v172 = vsel %vm50, %v158, 0.0
  %173 = vadd.xlane.f32.xlu0 %v172
  %v174 = vpop.xlane.xlu0 %173
  %v175 = vsel %vm50, %v159, 0.0
  %176 = vadd.xlane.f32.xlu0 %v175
  %v177 = vpop.xlane.xlu0 %176
  %v178 = vsel %vm50, %v160, 0.0
  %179 = vadd.xlane.f32.xlu0 %v178
  %v180 = vpop.xlane.xlu0 %179
  %v181 = vsel %vm50, %v161, 0.0
  %182 = vadd.xlane.f32.xlu0 %v181
  %v183 = vpop.xlane.xlu0 %182
  %v184 = vsel %vm50, %v162, 0.0
  %185 = vadd.xlane.f32.xlu0 %v184
  %v186 = vpop.xlane.xlu0 %185
  %v187 = vmul.f32 %v27, %v27
  %v188 = vmul.f32 %v28, %v28
  %v189 = vmul.f32 %v29, %v29
  %v190 = vmul.f32 %v30, %v30
  %v191 = vmul.f32 %v31, %v31
  %v192 = vmul.f32 %v32, %v32
  %v193 = vmul.f32 %v33, %v33
  %v194 = vmul.f32 %v34, %v34
  %v195 = vsel %vm50, %v187, 0.0
  %196 = vadd.xlane.f32.xlu0 %v195
  %v197 = vpop.xlane.xlu0 %196
  %v198 = vsel %vm50, %v188, 0.0
  %199 = vadd.xlane.f32.xlu0 %v198
  %v200 = vpop.xlane.xlu0 %199
  %v201 = vsel %vm50, %v189, 0.0
  %202 = vadd.xlane.f32.xlu0 %v201
  %v203 = vpop.xlane.xlu0 %202
  %v204 = vsel %vm50, %v190, 0.0
  %205 = vadd.xlane.f32.xlu0 %v204
  %v206 = vpop.xlane.xlu0 %205
  %v207 = vsel %vm50, %v191, 0.0
  %208 = vadd.xlane.f32.xlu0 %v207
  %v209 = vpop.xlane.xlu0 %208
  %v210 = vsel %vm50, %v192, 0.0
  %211 = vadd.xlane.f32.xlu0 %v210
  %v212 = vpop.xlane.xlu0 %211
  %v213 = vsel %vm50, %v193, 0.0
  %214 = vadd.xlane.f32.xlu0 %v213
  %v215 = vpop.xlane.xlu0 %214
  %v216 = vsel %vm50, %v194, 0.0
  %217 = vadd.xlane.f32.xlu0 %v216
  %v218 = vpop.xlane.xlu0 %217
  %v219 = vpack.c.bf16 %v19, %v19
  %v220 = vpack.c.bf16 %v20, %v20
  %v221 = vpack.c.bf16 %v21, %v21
  %v222 = vpack.c.bf16 %v22, %v22
  %v223 = vpack.c.bf16 %v23, %v23
  %v224 = vpack.c.bf16 %v24, %v24
  %v225 = vpack.c.bf16 %v25, %v25
  %v226 = vpack.c.bf16 %v26, %v26
  %v227 = vpack.c.bf16 %v27, %v27
  %v228 = vpack.c.bf16 %v28, %v28
  %v229 = vpack.c.bf16 %v29, %v29
  %v230 = vpack.c.bf16 %v30, %v30
  %v231 = vpack.c.bf16 %v31, %v31
  %v232 = vpack.c.bf16 %v32, %v32
  %v233 = vpack.c.bf16 %v33, %v33
  %v234 = vpack.c.bf16 %v34, %v34
  %v236 = vsel %vm50, %v219, 0
  %v239 = vsel %vm50, %v227, 0
  %241 = vmatprep.subr.bf16.mxu0 0
  %242 = vmatpush1.bf16.xpose.msra.mxu0 0
  %243 = vmatprep.subr.bf16.mxu0 0
  %244 = vmatpush1.bf16.xpose.msra.mxu0 0
  %245 = vmatprep.subr.bf16.mxu0 0
  %246 = vmatpush1.bf16.xpose.msra.mxu0 0
  %247 = vmatprep.subr.bf16.mxu0 0
  %248 = vmatpush1.bf16.xpose.msra.mxu0 0
  %249 = vmatprep.subr.bf16.mxu0 0
  %250 = vmatpush1.bf16.xpose.msra.mxu0 0
  %251 = vmatprep.subr.bf16.mxu0 0
  %252 = vmatpush1.bf16.xpose.msra.mxu0 0
  %253 = vmatprep.subr.bf16.mxu0 0
  %254 = vmatpush1.bf16.xpose.msra.mxu0 0
  %255 = vmatprep.subr.bf16.mxu0 0
  %256 = vmatpush1.bf16.xpose.msra.mxu0 %v239
  %257 = vmatprep.subr.bf16.mxu0 0
  %258 = vmatpush2.bf16.xpose.msra.mxu0 0
  %259 = vmatprep.subr.bf16.mxu0 0
  %260 = vmatpush2.bf16.xpose.msra.mxu0 0
  %261 = vmatprep.subr.bf16.mxu0 0
  %262 = vmatpush2.bf16.xpose.msra.mxu0 0
  %263 = vmatprep.subr.bf16.mxu0 0
  %264 = vmatpush2.bf16.xpose.msra.mxu0 0
  %265 = vmatprep.subr.bf16.mxu0 0
  %266 = vmatpush2.bf16.xpose.msra.mxu0 0
  %267 = vmatprep.subr.bf16.mxu0 0
  %268 = vmatpush2.bf16.xpose.msra.mxu0 0
  %269 = vmatprep.subr.bf16.mxu0 0
  %270 = vmatpush2.bf16.xpose.msra.mxu0 0
  %271 = vmatprep.subr.bf16.mxu0 0
  %272 = vmatpush2.bf16.xpose.msra.mxu0 0
  %273 = vmatprep.mubr.bf16.mxu0 0
  %274 = vmatmul.mubr.bf16.gmra.mxu0 %v236
  %v275 = vpop.f32.mrf.mxu0
  %v276 = vadd.f32 0.0, %v275
  %v277 = vpop.f32.mrf.mxu0
  %v278 = vpop.f32.mrf.mxu0
  %v279 = vpop.f32.mrf.mxu0
  %280 = vdwg.mxu0
  %v282 = vsel %vm50, %v220, 0
  %v285 = vsel %vm50, %v228, 0
  %287 = vmatprep.subr.bf16.mxu0 0
  %288 = vmatpush1.bf16.xpose.msra.mxu0 0
  %289 = vmatprep.subr.bf16.mxu0 0
  %290 = vmatpush1.bf16.xpose.msra.mxu0 0
  %291 = vmatprep.subr.bf16.mxu0 0
  %292 = vmatpush1.bf16.xpose.msra.mxu0 0
  %293 = vmatprep.subr.bf16.mxu0 0
  %294 = vmatpush1.bf16.xpose.msra.mxu0 0
  %295 = vmatprep.subr.bf16.mxu0 0
  %296 = vmatpush1.bf16.xpose.msra.mxu0 0
  %297 = vmatprep.subr.bf16.mxu0 0
  %298 = vmatpush1.bf16.xpose.msra.mxu0 0
  %299 = vmatprep.subr.bf16.mxu0 0
  %300 = vmatpush1.bf16.xpose.msra.mxu0 0
  %301 = vmatprep.subr.bf16.mxu0 0
  %302 = vmatpush1.bf16.xpose.msra.mxu0 %v285
  %303 = vmatprep.subr.bf16.mxu0 0
  %304 = vmatpush2.bf16.xpose.msra.mxu0 0
  %305 = vmatprep.subr.bf16.mxu0 0
  %306 = vmatpush2.bf16.xpose.msra.mxu0 0
  %307 = vmatprep.subr.bf16.mxu0 0
  %308 = vmatpush2.bf16.xpose.msra.mxu0 0
  %309 = vmatprep.subr.bf16.mxu0 0
  %310 = vmatpush2.bf16.xpose.msra.mxu0 0
  %311 = vmatprep.subr.bf16.mxu0 0
  %312 = vmatpush2.bf16.xpose.msra.mxu0 0
  %313 = vmatprep.subr.bf16.mxu0 0
  %314 = vmatpush2.bf16.xpose.msra.mxu0 0
  %315 = vmatprep.subr.bf16.mxu0 0
  %316 = vmatpush2.bf16.xpose.msra.mxu0 0
  %317 = vmatprep.subr.bf16.mxu0 0
  %318 = vmatpush2.bf16.xpose.msra.mxu0 0
  %319 = vmatprep.mubr.bf16.mxu0 0
  %320 = vmatmul.mubr.bf16.gmra.mxu0 %v282
  %v321 = vpop.f32.mrf.mxu0
  %v322 = vadd.f32 0.0, %v321
  %v323 = vpop.f32.mrf.mxu0
  %v324 = vpop.f32.mrf.mxu0
  %v325 = vpop.f32.mrf.mxu0
  %326 = vdwg.mxu0
  %v328 = vsel %vm50, %v221, 0
  %v331 = vsel %vm50, %v229, 0
  %333 = vmatprep.subr.bf16.mxu0 0
  %334 = vmatpush1.bf16.xpose.msra.mxu0 0
  %335 = vmatprep.subr.bf16.mxu0 0
  %336 = vmatpush1.bf16.xpose.msra.mxu0 0
  %337 = vmatprep.subr.bf16.mxu0 0
  %338 = vmatpush1.bf16.xpose.msra.mxu0 0
  %339 = vmatprep.subr.bf16.mxu0 0
  %340 = vmatpush1.bf16.xpose.msra.mxu0 0
  %341 = vmatprep.subr.bf16.mxu0 0
  %342 = vmatpush1.bf16.xpose.msra.mxu0 0
  %343 = vmatprep.subr.bf16.mxu0 0
  %344 = vmatpush1.bf16.xpose.msra.mxu0 0
  %345 = vmatprep.subr.bf16.mxu0 0
  %346 = vmatpush1.bf16.xpose.msra.mxu0 0
  %347 = vmatprep.subr.bf16.mxu0 0
  %348 = vmatpush1.bf16.xpose.msra.mxu0 %v331
  %349 = vmatprep.subr.bf16.mxu0 0
  %350 = vmatpush2.bf16.xpose.msra.mxu0 0
  %351 = vmatprep.subr.bf16.mxu0 0
  %352 = vmatpush2.bf16.xpose.msra.mxu0 0
  %353 = vmatprep.subr.bf16.mxu0 0
  %354 = vmatpush2.bf16.xpose.msra.mxu0 0
  %355 = vmatprep.subr.bf16.mxu0 0
  %356 = vmatpush2.bf16.xpose.msra.mxu0 0
  %357 = vmatprep.subr.bf16.mxu0 0
  %358 = vmatpush2.bf16.xpose.msra.mxu0 0
  %359 = vmatprep.subr.bf16.mxu0 0
  %360 = vmatpush2.bf16.xpose.msra.mxu0 0
  %361 = vmatprep.subr.bf16.mxu0 0
  %362 = vmatpush2.bf16.xpose.msra.mxu0 0
  %363 = vmatprep.subr.bf16.mxu0 0
  %364 = vmatpush2.bf16.xpose.msra.mxu0 0
  %365 = vmatprep.mubr.bf16.mxu0 0
  %366 = vmatmul.mubr.bf16.gmra.mxu0 %v328
  %v367 = vpop.f32.mrf.mxu0
  %v368 = vadd.f32 0.0, %v367
  %v369 = vpop.f32.mrf.mxu0
  %v370 = vpop.f32.mrf.mxu0
  %v371 = vpop.f32.mrf.mxu0
  %372 = vdwg.mxu0
  %v374 = vsel %vm50, %v222, 0
  %v377 = vsel %vm50, %v230, 0
  %379 = vmatprep.subr.bf16.mxu0 0
  %380 = vmatpush1.bf16.xpose.msra.mxu0 0
  %381 = vmatprep.subr.bf16.mxu0 0
  %382 = vmatpush1.bf16.xpose.msra.mxu0 0
  %383 = vmatprep.subr.bf16.mxu0 0
  %384 = vmatpush1.bf16.xpose.msra.mxu0 0
  %385 = vmatprep.subr.bf16.mxu0 0
  %386 = vmatpush1.bf16.xpose.msra.mxu0 0
  %387 = vmatprep.subr.bf16.mxu0 0
  %388 = vmatpush1.bf16.xpose.msra.mxu0 0
  %389 = vmatprep.subr.bf16.mxu0 0
  %390 = vmatpush1.bf16.xpose.msra.mxu0 0
  %391 = vmatprep.subr.bf16.mxu0 0
  %392 = vmatpush1.bf16.xpose.msra.mxu0 0
  %393 = vmatprep.subr.bf16.mxu0 0
  %394 = vmatpush1.bf16.xpose.msra.mxu0 %v377
  %395 = vmatprep.subr.bf16.mxu0 0
  %396 = vmatpush2.bf16.xpose.msra.mxu0 0
  %397 = vmatprep.subr.bf16.mxu0 0
  %398 = vmatpush2.bf16.xpose.msra.mxu0 0
  %399 = vmatprep.subr.bf16.mxu0 0
  %400 = vmatpush2.bf16.xpose.msra.mxu0 0
  %401 = vmatprep.subr.bf16.mxu0 0
  %402 = vmatpush2.bf16.xpose.msra.mxu0 0
  %403 = vmatprep.subr.bf16.mxu0 0
  %404 = vmatpush2.bf16.xpose.msra.mxu0 0
  %405 = vmatprep.subr.bf16.mxu0 0
  %406 = vmatpush2.bf16.xpose.msra.mxu0 0
  %407 = vmatprep.subr.bf16.mxu0 0
  %408 = vmatpush2.bf16.xpose.msra.mxu0 0
  %409 = vmatprep.subr.bf16.mxu0 0
  %410 = vmatpush2.bf16.xpose.msra.mxu0 0
  %411 = vmatprep.mubr.bf16.mxu0 0
  %412 = vmatmul.mubr.bf16.gmra.mxu0 %v374
  %v413 = vpop.f32.mrf.mxu0
  %v414 = vadd.f32 0.0, %v413
  %v415 = vpop.f32.mrf.mxu0
  %v416 = vpop.f32.mrf.mxu0
  %v417 = vpop.f32.mrf.mxu0
  %418 = vdwg.mxu0
  %v420 = vsel %vm50, %v223, 0
  %v423 = vsel %vm50, %v231, 0
  %425 = vmatprep.subr.bf16.mxu0 0
  %426 = vmatpush1.bf16.xpose.msra.mxu0 0
  %427 = vmatprep.subr.bf16.mxu0 0
  %428 = vmatpush1.bf16.xpose.msra.mxu0 0
  %429 = vmatprep.subr.bf16.mxu0 0
  %430 = vmatpush1.bf16.xpose.msra.mxu0 0
  %431 = vmatprep.subr.bf16.mxu0 0
  %432 = vmatpush1.bf16.xpose.msra.mxu0 0
  %433 = vmatprep.subr.bf16.mxu0 0
  %434 = vmatpush1.bf16.xpose.msra.mxu0 0
  %435 = vmatprep.subr.bf16.mxu0 0
  %436 = vmatpush1.bf16.xpose.msra.mxu0 0
  %437 = vmatprep.subr.bf16.mxu0 0
  %438 = vmatpush1.bf16.xpose.msra.mxu0 0
  %439 = vmatprep.subr.bf16.mxu0 0
  %440 = vmatpush1.bf16.xpose.msra.mxu0 %v423
  %441 = vmatprep.subr.bf16.mxu0 0
  %442 = vmatpush2.bf16.xpose.msra.mxu0 0
  %443 = vmatprep.subr.bf16.mxu0 0
  %444 = vmatpush2.bf16.xpose.msra.mxu0 0
  %445 = vmatprep.subr.bf16.mxu0 0
  %446 = vmatpush2.bf16.xpose.msra.mxu0 0
  %447 = vmatprep.subr.bf16.mxu0 0
  %448 = vmatpush2.bf16.xpose.msra.mxu0 0
  %449 = vmatprep.subr.bf16.mxu0 0
  %450 = vmatpush2.bf16.xpose.msra.mxu0 0
  %451 = vmatprep.subr.bf16.mxu0 0
  %452 = vmatpush2.bf16.xpose.msra.mxu0 0
  %453 = vmatprep.subr.bf16.mxu0 0
  %454 = vmatpush2.bf16.xpose.msra.mxu0 0
  %455 = vmatprep.subr.bf16.mxu0 0
  %456 = vmatpush2.bf16.xpose.msra.mxu0 0
  %457 = vmatprep.mubr.bf16.mxu0 0
  %458 = vmatmul.mubr.bf16.gmra.mxu0 %v420
  %v459 = vpop.f32.mrf.mxu0
  %v460 = vadd.f32 0.0, %v459
  %v461 = vpop.f32.mrf.mxu0
  %v462 = vpop.f32.mrf.mxu0
  %v463 = vpop.f32.mrf.mxu0
  %464 = vdwg.mxu0
  %v466 = vsel %vm50, %v224, 0
  %v469 = vsel %vm50, %v232, 0
  %471 = vmatprep.subr.bf16.mxu0 0
  %472 = vmatpush1.bf16.xpose.msra.mxu0 0
  %473 = vmatprep.subr.bf16.mxu0 0
  %474 = vmatpush1.bf16.xpose.msra.mxu0 0
  %475 = vmatprep.subr.bf16.mxu0 0
  %476 = vmatpush1.bf16.xpose.msra.mxu0 0
  %477 = vmatprep.subr.bf16.mxu0 0
  %478 = vmatpush1.bf16.xpose.msra.mxu0 0
  %479 = vmatprep.subr.bf16.mxu0 0
  %480 = vmatpush1.bf16.xpose.msra.mxu0 0
  %481 = vmatprep.subr.bf16.mxu0 0
  %482 = vmatpush1.bf16.xpose.msra.mxu0 0
  %483 = vmatprep.subr.bf16.mxu0 0
  %484 = vmatpush1.bf16.xpose.msra.mxu0 0
  %485 = vmatprep.subr.bf16.mxu0 0
  %486 = vmatpush1.bf16.xpose.msra.mxu0 %v469
  %487 = vmatprep.subr.bf16.mxu0 0
  %488 = vmatpush2.bf16.xpose.msra.mxu0 0
  %489 = vmatprep.subr.bf16.mxu0 0
  %490 = vmatpush2.bf16.xpose.msra.mxu0 0
  %491 = vmatprep.subr.bf16.mxu0 0
  %492 = vmatpush2.bf16.xpose.msra.mxu0 0
  %493 = vmatprep.subr.bf16.mxu0 0
  %494 = vmatpush2.bf16.xpose.msra.mxu0 0
  %495 = vmatprep.subr.bf16.mxu0 0
  %496 = vmatpush2.bf16.xpose.msra.mxu0 0
  %497 = vmatprep.subr.bf16.mxu0 0
  %498 = vmatpush2.bf16.xpose.msra.mxu0 0
  %499 = vmatprep.subr.bf16.mxu0 0
  %500 = vmatpush2.bf16.xpose.msra.mxu0 0
  %501 = vmatprep.subr.bf16.mxu0 0
  %502 = vmatpush2.bf16.xpose.msra.mxu0 0
  %503 = vmatprep.mubr.bf16.mxu0 0
  %504 = vmatmul.mubr.bf16.gmra.mxu0 %v466
  %v505 = vpop.f32.mrf.mxu0
  %v506 = vadd.f32 0.0, %v505
  %v507 = vpop.f32.mrf.mxu0
  %v508 = vpop.f32.mrf.mxu0
  %v509 = vpop.f32.mrf.mxu0
  %510 = vdwg.mxu0
  %v512 = vsel %vm50, %v225, 0
  %v515 = vsel %vm50, %v233, 0
  %517 = vmatprep.subr.bf16.mxu0 0
  %518 = vmatpush1.bf16.xpose.msra.mxu0 0
  %519 = vmatprep.subr.bf16.mxu0 0
  %520 = vmatpush1.bf16.xpose.msra.mxu0 0
  %521 = vmatprep.subr.bf16.mxu0 0
  %522 = vmatpush1.bf16.xpose.msra.mxu0 0
  %523 = vmatprep.subr.bf16.mxu0 0
  %524 = vmatpush1.bf16.xpose.msra.mxu0 0
  %525 = vmatprep.subr.bf16.mxu0 0
  %526 = vmatpush1.bf16.xpose.msra.mxu0 0
  %527 = vmatprep.subr.bf16.mxu0 0
  %528 = vmatpush1.bf16.xpose.msra.mxu0 0
  %529 = vmatprep.subr.bf16.mxu0 0
  %530 = vmatpush1.bf16.xpose.msra.mxu0 0
  %531 = vmatprep.subr.bf16.mxu0 0
  %532 = vmatpush1.bf16.xpose.msra.mxu0 %v515
  %533 = vmatprep.subr.bf16.mxu0 0
  %534 = vmatpush2.bf16.xpose.msra.mxu0 0
  %535 = vmatprep.subr.bf16.mxu0 0
  %536 = vmatpush2.bf16.xpose.msra.mxu0 0
  %537 = vmatprep.subr.bf16.mxu0 0
  %538 = vmatpush2.bf16.xpose.msra.mxu0 0
  %539 = vmatprep.subr.bf16.mxu0 0
  %540 = vmatpush2.bf16.xpose.msra.mxu0 0
  %541 = vmatprep.subr.bf16.mxu0 0
  %542 = vmatpush2.bf16.xpose.msra.mxu0 0
  %543 = vmatprep.subr.bf16.mxu0 0
  %544 = vmatpush2.bf16.xpose.msra.mxu0 0
  %545 = vmatprep.subr.bf16.mxu0 0
  %546 = vmatpush2.bf16.xpose.msra.mxu0 0
  %547 = vmatprep.subr.bf16.mxu0 0
  %548 = vmatpush2.bf16.xpose.msra.mxu0 0
  %549 = vmatprep.mubr.bf16.mxu0 0
  %550 = vmatmul.mubr.bf16.gmra.mxu0 %v512
  %v551 = vpop.f32.mrf.mxu0
  %v552 = vadd.f32 0.0, %v551
  %v553 = vpop.f32.mrf.mxu0
  %v554 = vpop.f32.mrf.mxu0
  %v555 = vpop.f32.mrf.mxu0
  %556 = vdwg.mxu0
  %v558 = vsel %vm50, %v226, 0
  %v561 = vsel %vm50, %v234, 0
  %563 = vmatprep.subr.bf16.mxu0 0
  %564 = vmatpush1.bf16.xpose.msra.mxu0 0
  %565 = vmatprep.subr.bf16.mxu0 0
  %566 = vmatpush1.bf16.xpose.msra.mxu0 0
  %567 = vmatprep.subr.bf16.mxu0 0
  %568 = vmatpush1.bf16.xpose.msra.mxu0 0
  %569 = vmatprep.subr.bf16.mxu0 0
  %570 = vmatpush1.bf16.xpose.msra.mxu0 0
  %571 = vmatprep.subr.bf16.mxu0 0
  %572 = vmatpush1.bf16.xpose.msra.mxu0 0
  %573 = vmatprep.subr.bf16.mxu0 0
  %574 = vmatpush1.bf16.xpose.msra.mxu0 0
  %575 = vmatprep.subr.bf16.mxu0 0
  %576 = vmatpush1.bf16.xpose.msra.mxu0 0
  %577 = vmatprep.subr.bf16.mxu0 0
  %578 = vmatpush1.bf16.xpose.msra.mxu0 %v561
  %579 = vmatprep.subr.bf16.mxu0 0
  %580 = vmatpush2.bf16.xpose.msra.mxu0 0
  %581 = vmatprep.subr.bf16.mxu0 0
  %582 = vmatpush2.bf16.xpose.msra.mxu0 0
  %583 = vmatprep.subr.bf16.mxu0 0
  %584 = vmatpush2.bf16.xpose.msra.mxu0 0
  %585 = vmatprep.subr.bf16.mxu0 0
  %586 = vmatpush2.bf16.xpose.msra.mxu0 0
  %587 = vmatprep.subr.bf16.mxu0 0
  %588 = vmatpush2.bf16.xpose.msra.mxu0 0
  %589 = vmatprep.subr.bf16.mxu0 0
  %590 = vmatpush2.bf16.xpose.msra.mxu0 0
  %591 = vmatprep.subr.bf16.mxu0 0
  %592 = vmatpush2.bf16.xpose.msra.mxu0 0
  %593 = vmatprep.subr.bf16.mxu0 0
  %594 = vmatpush2.bf16.xpose.msra.mxu0 0
  %595 = vmatprep.mubr.bf16.mxu0 0
  %596 = vmatmul.mubr.bf16.gmra.mxu0 %v558
  %v597 = vpop.f32.mrf.mxu0
  %v598 = vadd.f32 0.0, %v597
  %v599 = vpop.f32.mrf.mxu0
  %v600 = vpop.f32.mrf.mxu0
  %v601 = vpop.f32.mrf.mxu0
  %602 = vdwg.mxu0
  %v611 = vlaneseq
  %v612 = vand.u32 %v611, 127
  %v613 = vlaneseq
  %v614 = vshrl.u32 %v613, 7
  %v615 = vsub.s32 %v612, %v614
  %v616 = vrot.slane %v197, %v615
  %v617 = vlaneseq
  %v618 = vshrl.u32 %v617, 7
  %v619 = vsub.s32 %v612, %v618
  %v620 = vrot.slane %v200, %v619
  %v621 = vlaneseq
  %v622 = vshrl.u32 %v621, 7
  %v623 = vsub.s32 %v612, %v622
  %v624 = vrot.slane %v203, %v623
  %v625 = vlaneseq
  %v626 = vshrl.u32 %v625, 7
  %v627 = vsub.s32 %v612, %v626
  %v628 = vrot.slane %v206, %v627
  %v629 = vlaneseq
  %v630 = vshrl.u32 %v629, 7
  %v631 = vsub.s32 %v612, %v630
  %v632 = vrot.slane %v209, %v631
  %v633 = vlaneseq
  %v634 = vshrl.u32 %v633, 7
  %v635 = vsub.s32 %v612, %v634
  %v636 = vrot.slane %v212, %v635
  %v637 = vlaneseq
  %v638 = vshrl.u32 %v637, 7
  %v639 = vsub.s32 %v612, %v638
  %v640 = vrot.slane %v215, %v639
  %v641 = vlaneseq
  %v642 = vshrl.u32 %v641, 7
  %v643 = vsub.s32 %v612, %v642
  %v644 = vrot.slane %v218, %v643
  %vm645 = vcmask 1041409
  %vm646 = vcmask 1042434
  %v647 = vsel %vm646, %v616, %v616
  %vm648 = vcmask 1043459
  %v649 = vsel %vm648, %v616, %v647
  %vm650 = vcmask 1044484
  %v651 = vsel %vm650, %v616, %v649
  %vm652 = vcmask 1045509
  %v653 = vsel %vm652, %v616, %v651
  %vm654 = vcmask 1046534
  %v655 = vsel %vm654, %v616, %v653
  %vm656 = vcmask 1047559
  %v657 = vsel %vm656, %v616, %v655
  %v658 = vsel %vm646, %v620, %v620
  %v659 = vsel %vm648, %v620, %v658
  %v660 = vsel %vm650, %v620, %v659
  %v661 = vsel %vm652, %v620, %v660
  %v662 = vsel %vm654, %v620, %v661
  %v663 = vsel %vm656, %v620, %v662
  %v664 = vsel %vm646, %v624, %v624
  %v665 = vsel %vm648, %v624, %v664
  %v666 = vsel %vm650, %v624, %v665
  %v667 = vsel %vm652, %v624, %v666
  %v668 = vsel %vm654, %v624, %v667
  %v669 = vsel %vm656, %v624, %v668
  %v670 = vsel %vm646, %v628, %v628
  %v671 = vsel %vm648, %v628, %v670
  %v672 = vsel %vm650, %v628, %v671
  %v673 = vsel %vm652, %v628, %v672
  %v674 = vsel %vm654, %v628, %v673
  %v675 = vsel %vm656, %v628, %v674
  %v676 = vsel %vm646, %v632, %v632
  %v677 = vsel %vm648, %v632, %v676
  %v678 = vsel %vm650, %v632, %v677
  %v679 = vsel %vm652, %v632, %v678
  %v680 = vsel %vm654, %v632, %v679
  %v681 = vsel %vm656, %v632, %v680
  %v682 = vsel %vm646, %v636, %v636
  %v683 = vsel %vm648, %v636, %v682
  %v684 = vsel %vm650, %v636, %v683
  %v685 = vsel %vm652, %v636, %v684
  %v686 = vsel %vm654, %v636, %v685
  %v687 = vsel %vm656, %v636, %v686
  %v688 = vsel %vm646, %v640, %v640
  %v689 = vsel %vm648, %v640, %v688
  %v690 = vsel %vm650, %v640, %v689
  %v691 = vsel %vm652, %v640, %v690
  %v692 = vsel %vm654, %v640, %v691
  %v693 = vsel %vm656, %v640, %v692
  %v694 = vsel %vm646, %v644, %v644
  %v695 = vsel %vm648, %v644, %v694
  %v696 = vsel %vm650, %v644, %v695
  %v697 = vsel %vm652, %v644, %v696
  %v698 = vsel %vm654, %v644, %v697
  %v699 = vsel %vm656, %v644, %v698
  %v708 = vadd.f32 %v165, %v657
  %v709 = vadd.f32 %v168, %v663
  %v710 = vadd.f32 %v171, %v669
  %v711 = vadd.f32 %v174, %v675
  %v712 = vadd.f32 %v177, %v681
  %v713 = vadd.f32 %v180, %v687
  %v714 = vadd.f32 %v183, %v693
  %v715 = vadd.f32 %v186, %v699
  %v716 = vmul.f32 %v276, 2.0
  %v717 = vmul.f32 %v322, 2.0
  %v718 = vmul.f32 %v368, 2.0
  %v719 = vmul.f32 %v414, 2.0
  %v720 = vmul.f32 %v460, 2.0
  %v721 = vmul.f32 %v506, 2.0
  %v722 = vmul.f32 %v552, 2.0
  %v723 = vmul.f32 %v598, 2.0
  %v724 = vsub.f32 %v708, %v716
  %v725 = vsub.f32 %v709, %v717
  %v726 = vsub.f32 %v710, %v718
  %v727 = vsub.f32 %v711, %v719
  %v728 = vsub.f32 %v712, %v720
  %v729 = vsub.f32 %v713, %v721
  %v730 = vsub.f32 %v714, %v722
  %v731 = vsub.f32 %v715, %v723
  %v732 = vmax.f32 %v724, 0.0
  %v733 = vmax.f32 %v725, 0.0
  %v734 = vmax.f32 %v726, 0.0
  %v735 = vmax.f32 %v727, 0.0
  %v736 = vmax.f32 %v728, 0.0
  %v737 = vmax.f32 %v729, 0.0
  %v738 = vmax.f32 %v730, 0.0
  %v739 = vmax.f32 %v731, 0.0
  %v740 = vrsqrt.pop %v732
  %v741 = vmul.f32 %v732, %v740
  %vm742 = vcmp.eq.f32.partialorder %v732, inf
  %v743 = vsel %vm742, %v732, %v741
  %vm744 = vcmp.eq.f32.partialorder %v732, 0.0
  %v745 = vand.u32 %v732, 2147483648
  %v746 = vsel %vm744, %v745, %v743
  %v747 = vrsqrt.pop %v733
  %v748 = vmul.f32 %v733, %v747
  %vm749 = vcmp.eq.f32.partialorder %v733, inf
  %v750 = vsel %vm749, %v733, %v748
  %vm751 = vcmp.eq.f32.partialorder %v733, 0.0
  %v752 = vand.u32 %v733, 2147483648
  %v753 = vsel %vm751, %v752, %v750
  %v754 = vrsqrt.pop %v734
  %v755 = vmul.f32 %v734, %v754
  %vm756 = vcmp.eq.f32.partialorder %v734, inf
  %v757 = vsel %vm756, %v734, %v755
  %vm758 = vcmp.eq.f32.partialorder %v734, 0.0
  %v759 = vand.u32 %v734, 2147483648
  %v760 = vsel %vm758, %v759, %v757
  %v761 = vrsqrt.pop %v735
  %v762 = vmul.f32 %v735, %v761
  %vm763 = vcmp.eq.f32.partialorder %v735, inf
  %v764 = vsel %vm763, %v735, %v762
  %vm765 = vcmp.eq.f32.partialorder %v735, 0.0
  %v766 = vand.u32 %v735, 2147483648
  %v767 = vsel %vm765, %v766, %v764
  %v768 = vrsqrt.pop %v736
  %v769 = vmul.f32 %v736, %v768
  %vm770 = vcmp.eq.f32.partialorder %v736, inf
  %v771 = vsel %vm770, %v736, %v769
  %vm772 = vcmp.eq.f32.partialorder %v736, 0.0
  %v773 = vand.u32 %v736, 2147483648
  %v774 = vsel %vm772, %v773, %v771
  %v775 = vrsqrt.pop %v737
  %v776 = vmul.f32 %v737, %v775
  %vm777 = vcmp.eq.f32.partialorder %v737, inf
  %v778 = vsel %vm777, %v737, %v776
  %vm779 = vcmp.eq.f32.partialorder %v737, 0.0
  %v780 = vand.u32 %v737, 2147483648
  %v781 = vsel %vm779, %v780, %v778
  %v782 = vrsqrt.pop %v738
  %v783 = vmul.f32 %v738, %v782
  %vm784 = vcmp.eq.f32.partialorder %v738, inf
  %v785 = vsel %vm784, %v738, %v783
  %vm786 = vcmp.eq.f32.partialorder %v738, 0.0
  %v787 = vand.u32 %v738, 2147483648
  %v788 = vsel %vm786, %v787, %v785
  %v789 = vrsqrt.pop %v739
  %v790 = vmul.f32 %v739, %v789
  %vm791 = vcmp.eq.f32.partialorder %v739, inf
  %v792 = vsel %vm791, %v739, %v790
  %vm793 = vcmp.eq.f32.partialorder %v739, 0.0
  %v794 = vand.u32 %v739, 2147483648
  %v795 = vsel %vm793, %v794, %v792
  %v796 = vsub.f32 0.0, %v746
  %v797 = vsub.f32 0.0, %v753
  %v798 = vsub.f32 0.0, %v760
  %v799 = vsub.f32 0.0, %v767
  %v800 = vsub.f32 0.0, %v774
  %v801 = vsub.f32 0.0, %v781
  %v802 = vsub.f32 0.0, %v788
  %v803 = vsub.f32 0.0, %v795
  %v804 = vmul.f32 %v796, 1.442695
  %v805 = vpow.pop %v804
  %v806 = vmul.f32 %v797, 1.442695
  %v807 = vpow.pop %v806
  %v808 = vmul.f32 %v798, 1.442695
  %v809 = vpow.pop %v808
  %v810 = vmul.f32 %v799, 1.442695
  %v811 = vpow.pop %v810
  %v812 = vmul.f32 %v800, 1.442695
  %v813 = vpow.pop %v812
  %v814 = vmul.f32 %v801, 1.442695
  %v815 = vpow.pop %v814
  %v816 = vmul.f32 %v802, 1.442695
  %v817 = vpow.pop %v816
  %v818 = vmul.f32 %v803, 1.442695
  %v819 = vpow.pop %v818
  %v820 = vsel %vm50, %v27, 0.0
  %821 = vadd.xlane.f32.xlu0 %v820
  %v822 = vpop.xlane.xlu0 %821
  %v823 = vsel %vm50, %v28, 0.0
  %824 = vadd.xlane.f32.xlu0 %v823
  %v825 = vpop.xlane.xlu0 %824
  %v826 = vsel %vm50, %v29, 0.0
  %827 = vadd.xlane.f32.xlu0 %v826
  %v828 = vpop.xlane.xlu0 %827
  %v829 = vsel %vm50, %v30, 0.0
  %830 = vadd.xlane.f32.xlu0 %v829
  %v831 = vpop.xlane.xlu0 %830
  %v832 = vsel %vm50, %v31, 0.0
  %833 = vadd.xlane.f32.xlu0 %v832
  %v834 = vpop.xlane.xlu0 %833
  %v835 = vsel %vm50, %v32, 0.0
  %836 = vadd.xlane.f32.xlu0 %v835
  %v837 = vpop.xlane.xlu0 %836
  %v838 = vsel %vm50, %v33, 0.0
  %839 = vadd.xlane.f32.xlu0 %v838
  %v840 = vpop.xlane.xlu0 %839
  %v841 = vsel %vm50, %v34, 0.0
  %842 = vadd.xlane.f32.xlu0 %v841
  %v843 = vpop.xlane.xlu0 %842
  %vm844 = vcmp.ne.f32.partialorder %v822, 0.0
  %vm845 = vcmp.ne.f32.partialorder %v825, 0.0
  %vm846 = vcmp.ne.f32.partialorder %v828, 0.0
  %vm847 = vcmp.ne.f32.partialorder %v831, 0.0
  %vm848 = vcmp.ne.f32.partialorder %v834, 0.0
  %vm849 = vcmp.ne.f32.partialorder %v837, 0.0
  %vm850 = vcmp.ne.f32.partialorder %v840, 0.0
  %vm851 = vcmp.ne.f32.partialorder %v843, 0.0
  %v852 = vsel %vm844, 1, 0
  %v853 = vsel %vm845, 1, 0
  %v854 = vsel %vm846, 1, 0
  %v855 = vsel %vm847, 1, 0
  %v856 = vsel %vm848, 1, 0
  %v857 = vsel %vm849, 1, 0
  %v858 = vsel %vm850, 1, 0
  %v859 = vsel %vm851, 1, 0
  %v860 = vcvt.s32.f32 %v852
  %v861 = vcvt.s32.f32 %v853
  %v862 = vcvt.s32.f32 %v854
  %v863 = vcvt.s32.f32 %v855
  %v864 = vcvt.s32.f32 %v856
  %v865 = vcvt.s32.f32 %v857
  %v866 = vcvt.s32.f32 %v858
  %v867 = vcvt.s32.f32 %v859
  %v876 = vlaneseq
  %v877 = vshrl.u32 %v876, 7
  %v878 = vsub.s32 %v612, %v877
  %v879 = vrot.slane %v860, %v878
  %v880 = vlaneseq
  %v881 = vshrl.u32 %v880, 7
  %v882 = vsub.s32 %v612, %v881
  %v883 = vrot.slane %v861, %v882
  %v884 = vlaneseq
  %v885 = vshrl.u32 %v884, 7
  %v886 = vsub.s32 %v612, %v885
  %v887 = vrot.slane %v862, %v886
  %v888 = vlaneseq
  %v889 = vshrl.u32 %v888, 7
  %v890 = vsub.s32 %v612, %v889
  %v891 = vrot.slane %v863, %v890
  %v892 = vlaneseq
  %v893 = vshrl.u32 %v892, 7
  %v894 = vsub.s32 %v612, %v893
  %v895 = vrot.slane %v864, %v894
  %v896 = vlaneseq
  %v897 = vshrl.u32 %v896, 7
  %v898 = vsub.s32 %v612, %v897
  %v899 = vrot.slane %v865, %v898
  %v900 = vlaneseq
  %v901 = vshrl.u32 %v900, 7
  %v902 = vsub.s32 %v612, %v901
  %v903 = vrot.slane %v866, %v902
  %v904 = vlaneseq
  %v905 = vshrl.u32 %v904, 7
  %v906 = vsub.s32 %v612, %v905
  %v907 = vrot.slane %v867, %v906
  %v908 = vsel %vm646, %v879, %v879
  %v909 = vsel %vm648, %v879, %v908
  %v910 = vsel %vm650, %v879, %v909
  %v911 = vsel %vm652, %v879, %v910
  %v912 = vsel %vm654, %v879, %v911
  %v913 = vsel %vm656, %v879, %v912
  %v914 = vsel %vm646, %v883, %v883
  %v915 = vsel %vm648, %v883, %v914
  %v916 = vsel %vm650, %v883, %v915
  %v917 = vsel %vm652, %v883, %v916
  %v918 = vsel %vm654, %v883, %v917
  %v919 = vsel %vm656, %v883, %v918
  %v920 = vsel %vm646, %v887, %v887
  %v921 = vsel %vm648, %v887, %v920
  %v922 = vsel %vm650, %v887, %v921
  %v923 = vsel %vm652, %v887, %v922
  %v924 = vsel %vm654, %v887, %v923
  %v925 = vsel %vm656, %v887, %v924
  %v926 = vsel %vm646, %v891, %v891
  %v927 = vsel %vm648, %v891, %v926
  %v928 = vsel %vm650, %v891, %v927
  %v929 = vsel %vm652, %v891, %v928
  %v930 = vsel %vm654, %v891, %v929
  %v931 = vsel %vm656, %v891, %v930
  %v932 = vsel %vm646, %v895, %v895
  %v933 = vsel %vm648, %v895, %v932
  %v934 = vsel %vm650, %v895, %v933
  %v935 = vsel %vm652, %v895, %v934
  %v936 = vsel %vm654, %v895, %v935
  %v937 = vsel %vm656, %v895, %v936
  %v938 = vsel %vm646, %v899, %v899
  %v939 = vsel %vm648, %v899, %v938
  %v940 = vsel %vm650, %v899, %v939
  %v941 = vsel %vm652, %v899, %v940
  %v942 = vsel %vm654, %v899, %v941
  %v943 = vsel %vm656, %v899, %v942
  %v944 = vsel %vm646, %v903, %v903
  %v945 = vsel %vm648, %v903, %v944
  %v946 = vsel %vm650, %v903, %v945
  %v947 = vsel %vm652, %v903, %v946
  %v948 = vsel %vm654, %v903, %v947
  %v949 = vsel %vm656, %v903, %v948
  %v950 = vsel %vm646, %v907, %v907
  %v951 = vsel %vm648, %v907, %v950
  %v952 = vsel %vm650, %v907, %v951
  %v953 = vsel %vm652, %v907, %v952
  %v954 = vsel %vm654, %v907, %v953
  %v955 = vsel %vm656, %v907, %v954
  %v964 = vmul.f32 %v805, %v913
  %v965 = vmul.f32 %v807, %v919
  %v966 = vmul.f32 %v809, %v925
  %v967 = vmul.f32 %v811, %v931
  %v968 = vmul.f32 %v813, %v937
  %v969 = vmul.f32 %v815, %v943
  %v970 = vmul.f32 %v817, %v949
  %v971 = vmul.f32 %v819, %v955
  %vm972 = vcmask 64512
  %v973 = vsel %vm972, %v964, 0.0
  %974 = vadd.xlane.f32.xlu0 %v973
  %v975 = vpop.xlane.xlu0 %974
  %v976 = vsel %vm972, %v965, 0.0
  %977 = vadd.xlane.f32.xlu0 %v976
  %v978 = vpop.xlane.xlu0 %977
  %v979 = vsel %vm972, %v966, 0.0
  %980 = vadd.xlane.f32.xlu0 %v979
  %v981 = vpop.xlane.xlu0 %980
  %v982 = vsel %vm972, %v967, 0.0
  %983 = vadd.xlane.f32.xlu0 %v982
  %v984 = vpop.xlane.xlu0 %983
  %v985 = vsel %vm972, %v968, 0.0
  %986 = vadd.xlane.f32.xlu0 %v985
  %v987 = vpop.xlane.xlu0 %986
  %v988 = vsel %vm972, %v969, 0.0
  %989 = vadd.xlane.f32.xlu0 %v988
  %v990 = vpop.xlane.xlu0 %989
  %v991 = vsel %vm972, %v970, 0.0
  %992 = vadd.xlane.f32.xlu0 %v991
  %v993 = vpop.xlane.xlu0 %992
  %v994 = vsel %vm972, %v971, 0.0
  %995 = vadd.xlane.f32.xlu0 %v994
  %v996 = vpop.xlane.xlu0 %995
  %v997 = vrot.slane %v147, 4
  %v998 = vmax.f32 %v147, %v997
  %v999 = vrot.slane %v998, 2
  %v1000 = vmax.f32 %v998, %v999
  %v1001 = vrot.slane %v1000, 1
  %v1002 = vmax.f32 %v1000, %v1001
  %v1003 = vrot.slane %v148, 4
  %v1004 = vmax.f32 %v148, %v1003
  %v1005 = vrot.slane %v1004, 2
  %v1006 = vmax.f32 %v1004, %v1005
  %v1007 = vrot.slane %v1006, 1
  %v1008 = vmax.f32 %v1006, %v1007
  %v1009 = vrot.slane %v149, 4
  %v1010 = vmax.f32 %v149, %v1009
  %v1011 = vrot.slane %v1010, 2
  %v1012 = vmax.f32 %v1010, %v1011
  %v1013 = vrot.slane %v1012, 1
  %v1014 = vmax.f32 %v1012, %v1013
  %v1015 = vrot.slane %v150, 4
  %v1016 = vmax.f32 %v150, %v1015
  %v1017 = vrot.slane %v1016, 2
  %v1018 = vmax.f32 %v1016, %v1017
  %v1019 = vrot.slane %v1018, 1
  %v1020 = vmax.f32 %v1018, %v1019
  %v1021 = vrot.slane %v151, 4
  %v1022 = vmax.f32 %v151, %v1021
  %v1023 = vrot.slane %v1022, 2
  %v1024 = vmax.f32 %v1022, %v1023
  %v1025 = vrot.slane %v1024, 1
  %v1026 = vmax.f32 %v1024, %v1025
  %v1027 = vrot.slane %v152, 4
  %v1028 = vmax.f32 %v152, %v1027
  %v1029 = vrot.slane %v1028, 2
  %v1030 = vmax.f32 %v1028, %v1029
  %v1031 = vrot.slane %v1030, 1
  %v1032 = vmax.f32 %v1030, %v1031
  %v1033 = vrot.slane %v153, 4
  %v1034 = vmax.f32 %v153, %v1033
  %v1035 = vrot.slane %v1034, 2
  %v1036 = vmax.f32 %v1034, %v1035
  %v1037 = vrot.slane %v1036, 1
  %v1038 = vmax.f32 %v1036, %v1037
  %v1039 = vrot.slane %v154, 4
  %v1040 = vmax.f32 %v154, %v1039
  %v1041 = vrot.slane %v1040, 2
  %v1042 = vmax.f32 %v1040, %v1041
  %v1043 = vrot.slane %v1042, 1
  %v1044 = vmax.f32 %v1042, %v1043
  %v1045 = vsub.f32 %v147, %v1002
  %v1046 = vsub.f32 %v148, %v1008
  %v1047 = vsub.f32 %v149, %v1014
  %v1048 = vsub.f32 %v150, %v1020
  %v1049 = vsub.f32 %v151, %v1026
  %v1050 = vsub.f32 %v152, %v1032
  %v1051 = vsub.f32 %v153, %v1038
  %v1052 = vsub.f32 %v154, %v1044
  %v1053 = vmul.f32 %v1045, 1.442695
  %v1054 = vpow.pop %v1053
  %v1055 = vmul.f32 %v1046, 1.442695
  %v1056 = vpow.pop %v1055
  %v1057 = vmul.f32 %v1047, 1.442695
  %v1058 = vpow.pop %v1057
  %v1059 = vmul.f32 %v1048, 1.442695
  %v1060 = vpow.pop %v1059
  %v1061 = vmul.f32 %v1049, 1.442695
  %v1062 = vpow.pop %v1061
  %v1063 = vmul.f32 %v1050, 1.442695
  %v1064 = vpow.pop %v1063
  %v1065 = vmul.f32 %v1051, 1.442695
  %v1066 = vpow.pop %v1065
  %v1067 = vmul.f32 %v1052, 1.442695
  %v1068 = vpow.pop %v1067
  %v1069 = vmul.f32 %v975, %v1054
  %v1070 = vmul.f32 %v978, %v1056
  %v1071 = vmul.f32 %v981, %v1058
  %v1072 = vmul.f32 %v984, %v1060
  %v1073 = vmul.f32 %v987, %v1062
  %v1074 = vmul.f32 %v990, %v1064
  %v1075 = vmul.f32 %v993, %v1066
  %v1076 = vmul.f32 %v996, %v1068
  %v1077 = vrot.slane %v1069, 4
  %v1078 = vadd.f32 %v1069, %v1077
  %v1079 = vrot.slane %v1078, 2
  %v1080 = vadd.f32 %v1078, %v1079
  %v1081 = vrot.slane %v1080, 1
  %v1082 = vadd.f32 %v1080, %v1081
  %v1083 = vrot.slane %v1070, 4
  %v1084 = vadd.f32 %v1070, %v1083
  %v1085 = vrot.slane %v1084, 2
  %v1086 = vadd.f32 %v1084, %v1085
  %v1087 = vrot.slane %v1086, 1
  %v1088 = vadd.f32 %v1086, %v1087
  %v1089 = vrot.slane %v1071, 4
  %v1090 = vadd.f32 %v1071, %v1089
  %v1091 = vrot.slane %v1090, 2
  %v1092 = vadd.f32 %v1090, %v1091
  %v1093 = vrot.slane %v1092, 1
  %v1094 = vadd.f32 %v1092, %v1093
  %v1095 = vrot.slane %v1072, 4
  %v1096 = vadd.f32 %v1072, %v1095
  %v1097 = vrot.slane %v1096, 2
  %v1098 = vadd.f32 %v1096, %v1097
  %v1099 = vrot.slane %v1098, 1
  %v1100 = vadd.f32 %v1098, %v1099
  %v1101 = vrot.slane %v1073, 4
  %v1102 = vadd.f32 %v1073, %v1101
  %v1103 = vrot.slane %v1102, 2
  %v1104 = vadd.f32 %v1102, %v1103
  %v1105 = vrot.slane %v1104, 1
  %v1106 = vadd.f32 %v1104, %v1105
  %v1107 = vrot.slane %v1074, 4
  %v1108 = vadd.f32 %v1074, %v1107
  %v1109 = vrot.slane %v1108, 2
  %v1110 = vadd.f32 %v1108, %v1109
  %v1111 = vrot.slane %v1110, 1
  %v1112 = vadd.f32 %v1110, %v1111
  %v1113 = vrot.slane %v1075, 4
  %v1114 = vadd.f32 %v1075, %v1113
  %v1115 = vrot.slane %v1114, 2
  %v1116 = vadd.f32 %v1114, %v1115
  %v1117 = vrot.slane %v1116, 1
  %v1118 = vadd.f32 %v1116, %v1117
  %v1119 = vrot.slane %v1076, 4
  %v1120 = vadd.f32 %v1076, %v1119
  %v1121 = vrot.slane %v1120, 2
  %v1122 = vadd.f32 %v1120, %v1121
  %v1123 = vrot.slane %v1122, 1
  %v1124 = vadd.f32 %v1122, %v1123
  %v1125 = vrcp.pop %v1082
  %v1126 = vrcp.pop %v1088
  %v1127 = vrcp.pop %v1094
  %v1128 = vrcp.pop %v1100
  %v1129 = vrcp.pop %v1106
  %v1130 = vrcp.pop %v1112
  %v1131 = vrcp.pop %v1118
  %v1132 = vrcp.pop %v1124
  %v1133 = vmul.f32 %v1069, %v1125
  %v1134 = vmul.f32 %v1070, %v1126
  %v1135 = vmul.f32 %v1071, %v1127
  %v1136 = vmul.f32 %v1072, %v1128
  %v1137 = vmul.f32 %v1073, %v1129
  %v1138 = vmul.f32 %v1074, %v1130
  %v1139 = vmul.f32 %v1075, %v1131
  %v1140 = vmul.f32 %v1076, %v1132
  %v1141 = vmul.f32 %v19, %v1133
  %v1142 = vmul.f32 %v20, %v1134
  %v1143 = vmul.f32 %v21, %v1135
  %v1144 = vmul.f32 %v22, %v1136
  %v1145 = vmul.f32 %v23, %v1137
  %v1146 = vmul.f32 %v24, %v1138
  %v1147 = vmul.f32 %v25, %v1139
  %v1148 = vmul.f32 %v26, %v1140
  %v1149 = vsel %vm50, %v1141, 0.0
  %v1150 = vrot.slane %v1149, 4
  %v1151 = vadd.f32 %v1149, %v1150
  %v1152 = vrot.slane %v1151, 2
  %v1153 = vadd.f32 %v1151, %v1152
  %v1154 = vrot.slane %v1153, 1
  %v1155 = vadd.f32 %v1153, %v1154
  %v1156 = vsel %vm50, %v1142, 0.0
  %v1157 = vrot.slane %v1156, 4
  %v1158 = vadd.f32 %v1156, %v1157
  %v1159 = vrot.slane %v1158, 2
  %v1160 = vadd.f32 %v1158, %v1159
  %v1161 = vrot.slane %v1160, 1
  %v1162 = vadd.f32 %v1160, %v1161
  %v1163 = vsel %vm50, %v1143, 0.0
  %v1164 = vrot.slane %v1163, 4
  %v1165 = vadd.f32 %v1163, %v1164
  %v1166 = vrot.slane %v1165, 2
  %v1167 = vadd.f32 %v1165, %v1166
  %v1168 = vrot.slane %v1167, 1
  %v1169 = vadd.f32 %v1167, %v1168
  %v1170 = vsel %vm50, %v1144, 0.0
  %v1171 = vrot.slane %v1170, 4
  %v1172 = vadd.f32 %v1170, %v1171
  %v1173 = vrot.slane %v1172, 2
  %v1174 = vadd.f32 %v1172, %v1173
  %v1175 = vrot.slane %v1174, 1
  %v1176 = vadd.f32 %v1174, %v1175
  %v1177 = vsel %vm50, %v1145, 0.0
  %v1178 = vrot.slane %v1177, 4
  %v1179 = vadd.f32 %v1177, %v1178
  %v1180 = vrot.slane %v1179, 2
  %v1181 = vadd.f32 %v1179, %v1180
  %v1182 = vrot.slane %v1181, 1
  %v1183 = vadd.f32 %v1181, %v1182
  %v1184 = vsel %vm50, %v1146, 0.0
  %v1185 = vrot.slane %v1184, 4
  %v1186 = vadd.f32 %v1184, %v1185
  %v1187 = vrot.slane %v1186, 2
  %v1188 = vadd.f32 %v1186, %v1187
  %v1189 = vrot.slane %v1188, 1
  %v1190 = vadd.f32 %v1188, %v1189
  %v1191 = vsel %vm50, %v1147, 0.0
  %v1192 = vrot.slane %v1191, 4
  %v1193 = vadd.f32 %v1191, %v1192
  %v1194 = vrot.slane %v1193, 2
  %v1195 = vadd.f32 %v1193, %v1194
  %v1196 = vrot.slane %v1195, 1
  %v1197 = vadd.f32 %v1195, %v1196
  %v1198 = vsel %vm50, %v1148, 0.0
  %v1199 = vrot.slane %v1198, 4
  %v1200 = vadd.f32 %v1198, %v1199
  %v1201 = vrot.slane %v1200, 2
  %v1202 = vadd.f32 %v1200, %v1201
  %v1203 = vrot.slane %v1202, 1
  %v1204 = vadd.f32 %v1202, %v1203
  %v1205 = vmax.f32 %v1155, 0.0
  %v1206 = vmax.f32 %v1162, 0.0
  %v1207 = vmax.f32 %v1169, 0.0
  %v1208 = vmax.f32 %v1176, 0.0
  %v1209 = vmax.f32 %v1183, 0.0
  %v1210 = vmax.f32 %v1190, 0.0
  %v1211 = vmax.f32 %v1197, 0.0
  %v1212 = vmax.f32 %v1204, 0.0
  %v1221 = vsel %vm645, %v1206, %v1205
  %v1222 = vsel %vm646, %v1207, %v1221
  %v1223 = vsel %vm648, %v1208, %v1222
  %v1224 = vsel %vm650, %v1209, %v1223
  %v1225 = vsel %vm652, %v1210, %v1224
  %v1226 = vsel %vm654, %v1211, %v1225
  %v1227 = vsel %vm656, %v1212, %v1226
  %1229 = vst.msk [vmem:[%s4] sm:$0xff] %vm50, %v1227
  // Predicated region
  $region18: #{small_graph_align_net.7} parent=0 // pred_check
    _
  $region19: #{small_graph_align_net.7} parent=0 // pred_check_branch
    %1231 = sbr.rel (0) target = $region21
  $region20: #{small_graph_align_net.7} parent=0 // pred_region
    _
  $region21: #{small_graph_align_net.7} parent=0 // pred_fallthru
    _
  // Predicated region
  $region22: #{small_graph_align_net.7} parent=0 // pred_check
    _
  $region23: #{small_graph_align_net.7} parent=0 // pred_check_branch
    %1233 = sbr.rel (0) target = $region25
  $region24: #{small_graph_align_net.7} parent=0 // pred_region
    _
  $region25: #{small_graph_align_net.7} parent=0 // pred_fallthru
    _

</llo_original>
